<compile_context>
chip_gen: v5e
topology: v5e:2x2
jax: 0.10.0
libtpu: 0.0.40
codegen_flags: <defaults>
</compile_context>

<pallas_src>
import functools

import jax
import jax.numpy as jnp
from jax import lax
from jax.experimental import pallas as pl
from jax.experimental.pallas import tpu as pltpu

JOINT_NUM = 21
ROOT_IDX = 0
_OUT_LANES = 128   # packed scalar row: lanes 0..5 = losses, 6 = mpjpe num, 7 = mpjpe den
_LANE_BLOCK = 512  # lane (BT) block size when the BT axis is tiled


# --------------------------------------------------------------------------
# Fused Pallas kernel: all six masked-L1 sums + Info/mpjpe partials per block
# --------------------------------------------------------------------------

def _fused_criterion_kernel(
    # joint family: (C, J, Bt) -- coords leading, joints on sublanes, BT on lanes
    joint_ref, gt_joint_ref, gt_joint_mano_ref,        # (3, J, Bt)
    valid_joint_ref, valid_joint_mano_ref,             # (J, Bt)
    joint_proj_ref,                                     # (2, J, Bt)
    valid_joint_2d_ref,                                 # (J, Bt)
    joint_hm_ref, gt_joint_3d_ref,                      # (3, J, Bt)
    # parameter losses: features on sublanes, BT on lanes
    pose_ref, gt_pose_ref, valid_pose_ref,              # (P, Bt)
    shape_ref, gt_shape_ref,                             # (S, Bt)
    valid_shape_ref,                                      # (1, Bt)
    out_ref,                                              # (8, 128) resident accumulator
    *, scales):
    f32 = jnp.float32
    r = pl.program_id(1)   # reduction ("arbitrary") axis over BT blocks

    @pl.when(r == 0)
    def _init():
        out_ref[...] = jnp.zeros_like(out_ref)

    # Cast-on-load (inputs may be bf16); arithmetic stays f32 (v5e-safe).
    joint = joint_ref[...].astype(f32)
    gt_joint = gt_joint_ref[...].astype(f32)
    gt_joint_mano = gt_joint_mano_ref[...].astype(f32)
    valid_joint = valid_joint_ref[...].astype(f32)
    valid_joint_mano = valid_joint_mano_ref[...].astype(f32)
    joint_proj = joint_proj_ref[...].astype(f32)
    valid_joint_2d = valid_joint_2d_ref[...].astype(f32)
    joint_hm = joint_hm_ref[...].astype(f32)
    gt_joint_3d = gt_joint_3d_ref[...].astype(f32)
    gt_joint_2d = gt_joint_3d[:2]          # rows 0:2 == joint_img[..., :2]; no extra input
    pose = pose_ref[...].astype(f32)
    gt_pose = gt_pose_ref[...].astype(f32)
    valid_pose = valid_pose_ref[...].astype(f32)
    shape = shape_ref[...].astype(f32)
    gt_shape = gt_shape_ref[...].astype(f32)
    valid_shape = valid_shape_ref[...].astype(f32)

    def masked_l1_sum(pred, gt, valid):
        # |pred - gt| * valid (valid broadcasts over the coord/feature axis),
        # where()-guarded so NaN/garbage gt at invalid entries can't poison the
        # sum.  Matches CoordLoss/ParamLoss + .mean(): the /count is folded
        # into the static `scales` constants (padded lanes have valid == 0).
        return jnp.sum(jnp.where(valid > 0.0, jnp.abs(pred - gt) * valid, 0.0))

    l_joint      = scales[0] * masked_l1_sum(joint, gt_joint, valid_joint)
    l_joint_mano = scales[1] * masked_l1_sum(joint, gt_joint_mano, valid_joint_mano)
    l_joint_proj = scales[2] * masked_l1_sum(joint_proj, gt_joint_2d, valid_joint_2d)
    l_joint_hm   = scales[3] * masked_l1_sum(joint_hm, gt_joint_3d, valid_joint_2d)
    l_pose       = scales[4] * masked_l1_sum(pose, gt_pose, valid_pose)
    l_shape      = scales[5] * masked_l1_sum(shape, gt_shape, valid_shape)

    # ---- Info/mpjpe: nanmean over valid joints per (bs,t), then nanmean over
    #      (bs,t) groups with >=1 valid joint.  Each BT block holds complete
    #      groups (J is entirely on sublanes), so per-group means are exact per
    #      block; we accumulate sum(per-group mean) and count(valid groups).
    d = joint - gt_joint                                   # (3, J, Bt)
    sq = d[0] * d[0] + d[1] * d[1] + d[2] * d[2]           # (J, Bt) -- unrolled coord sum
    jpe = jnp.sqrt(sq) * 1000.0                            # (J, Bt)
    has_j = valid_joint > 0.0                              # (J, Bt)
    jpe_v = jnp.where(has_j, jpe, 0.0)                     # guard NaN gt at invalid joints
    s = jnp.sum(jpe_v, axis=0, keepdims=True)              # (1, Bt) sublane (XLU) reduce
    c = jnp.sum(has_j.astype(f32), axis=0, keepdims=True)  # (1, Bt)
    has_g = c > 0.0                                        # padded / all-invalid groups -> False
    per = jnp.where(has_g, s / jnp.where(has_g, c, 1.0), 0.0)
    mp_num = jnp.sum(per)                                  # sum of per-group means
    mp_den = jnp.sum(has_g.astype(f32))                    # number of valid groups

    # ---- pack the eight partial scalars into the resident (8,128) output ----
    vals = (l_joint, l_joint_mano, l_joint_proj, l_joint_hm,
            l_pose, l_shape, mp_num, mp_den)
    lane = lax.broadcasted_iota(jnp.int32, (8, _OUT_LANES), 1)
    packed = jnp.zeros((8, _OUT_LANES), f32)
    for i, v in enumerate(vals):
        packed = jnp.where(lane == i, v, packed)
    out_ref[...] += packed


# --------------------------------------------------------------------------
# Wrapper
# --------------------------------------------------------------------------

def _round_up(x, m):
    return ((x + m - 1) // m) * m


def criterion_train_losses(preds, targets, meta_info, loss_weights):
    joint = preds['joint']
    joint_proj = preds['joint_proj']
    joint_hm = preds['joint_hm']
    pose = preds['pose']
    shape = preds['shape']

    gt_joint = targets['joint_cam']
    gt_joint_mano = targets['mano_joint_cam']
    gt_joint_3d = targets['joint_img']            # rows [:2] provide gt_joint_2d in-kernel
    gt_pose = targets['mano_pose']
    gt_shape = targets['mano_shape']

    valid_joint = meta_info['joint_valid']
    valid_joint_mano = meta_info['mano_joint_valid']
    valid_joint_2d = meta_info['joint_trunc']
    valid_pose = meta_info['mano_pose_valid']
    valid_shape = meta_info['mano_shape_valid'][..., None]   # unsqueeze(-1)

    BS, T, J, _ = joint.shape
    BT = BS * T
    P = pose.shape[-1]
    S = shape.shape[-1]

    # ---- BT (lane) blocking ------------------------------------------------
    if BT >= 2 * _LANE_BLOCK:
        block_bt = _LANE_BLOCK
        bt_pad = _round_up(BT, _LANE_BLOCK)      # zero-padded lanes contribute nothing
    else:
        block_bt = BT                            # single fully-resident block; block ==
        bt_pad = BT                              # full dim, so no (8,128) constraint / pad
    n_blocks = bt_pad // block_bt
    n_par = 2 if (n_blocks % 2 == 0 and n_blocks >= 2) else 1   # v7x: 2 TCs
    n_red = n_blocks // n_par

    # ---- layout plumbing: (BS,T,J,C) -> (C, J, BT) etc. ---------------------
    def to_cjb(x):
        c = x.shape[-1]
        y = jnp.transpose(x.reshape(BT, J, c), (2, 1, 0))        # (C, J, BT)
        if bt_pad != BT:
            y = jnp.pad(y, ((0, 0), (0, 0), (0, bt_pad - BT)))
        return y

    def to_jb(m):                                                 # (BS,T,J,1) -> (J, BT)
        y = m.reshape(BT, J).T
        if bt_pad != BT:
            y = jnp.pad(y, ((0, 0), (0, bt_pad - BT)))
        return y

    def to_fb(x):                                                 # (BS,T,F) -> (F, BT)
        y = x.reshape(BT, -1).T
        if bt_pad != BT:
            y = jnp.pad(y, ((0, 0), (0, bt_pad - BT)))
        return y

    # loss_weight / element_count folded into one static constant per loss
    n_joint = float(BT * J * 3)
    n_proj = float(BT * J * 2)
    scales = (
        float(loss_weights['joint']) / n_joint,
        float(loss_weights['joint']) / n_joint,
        float(loss_weights['joint_proj']) / n_proj,
        float(loss_weights['joint_hm']) / n_joint,
        1.0 / float(BT * P),
        1.0 / float(BT * S),
    )

    def cjb_spec(c):
        return pl.BlockSpec((c, J, block_bt), lambda p, r: (0, 0, p * n_red + r))

    def jb_spec():
        return pl.BlockSpec((J, block_bt), lambda p, r: (0, p * n_red + r))

    def fb_spec(f):
        return pl.BlockSpec((f, block_bt), lambda p, r: (0, p * n_red + r))

    kernel = functools.partial(_fused_criterion_kernel, scales=scales)

    partials = pl.pallas_call(
        kernel,
        out_shape=jax.ShapeDtypeStruct((n_par, 8, _OUT_LANES), jnp.float32),
        grid_spec=pltpu.PrefetchScalarGridSpec(
            num_scalar_prefetch=0,
            grid=(n_par, n_red),
            in_specs=[
                cjb_spec(3),   # joint
                cjb_spec(3),   # gt_joint
                cjb_spec(3),   # gt_joint_mano
                jb_spec(),     # valid_joint
                jb_spec(),     # valid_joint_mano
                cjb_spec(2),   # joint_proj
                jb_spec(),     # valid_joint_2d
                cjb_spec(3),   # joint_hm
                cjb_spec(3),   # gt_joint_3d (also provides gt_joint_2d)
                fb_spec(P),    # pose
                fb_spec(P),    # gt_pose
                fb_spec(P),    # valid_pose
                fb_spec(S),    # shape
                fb_spec(S),    # gt_shape
                fb_spec(1),    # valid_shape
            ],
            out_specs=pl.BlockSpec((None, 8, _OUT_LANES), lambda p, r: (p, 0, 0)),
        ),
        compiler_params=pltpu.CompilerParams(
            dimension_semantics=("parallel", "arbitrary")),
    )(
        to_cjb(joint), to_cjb(gt_joint), to_cjb(gt_joint_mano),
        to_jb(valid_joint), to_jb(valid_joint_mano),
        to_cjb(joint_proj),
        to_jb(valid_joint_2d),
        to_cjb(joint_hm), to_cjb(gt_joint_3d),
        to_fb(pose), to_fb(gt_pose), to_fb(valid_pose),
        to_fb(shape), to_fb(gt_shape), to_fb(valid_shape),
    )

    # Final combine of the per-core partial rows: 8 scalars of XLA.
    row = jnp.sum(partials[:, 0, :], axis=0)                 # (128,)
    num, den = row[6], row[7]
    mpjpe = jnp.where(den > 0.0, num / jnp.maximum(den, 1.0), jnp.nan)

    return {
        'Loss/joint': row[0],
        'Loss/joint_mano': row[1],
        'Loss/joint_proj': row[2],
        'Loss/joint_hm': row[3],
        'Loss/mano_pose': row[4],
        'Loss/mano_shape': row[5],
        'Info/mpjpe': mpjpe,
    }


class Criterion:
    """JAX/Pallas port of src/training/criterion_bhn.py::Criterion (train mode)."""

    def __init__(self, opt) -> None:
        self.ROOT_IDX = ROOT_IDX
        self.JOINT_NUM = JOINT_NUM
        self.opt_params = opt['task_parameters']
        self.num_k_select = opt['task_parameters']['num_k_select']
        if opt.get('train', False):
            self.opt_loss = opt['train']['loss']

    def forward(self, preds, targets, meta_info, mode=None):
        if mode == 'train':
            return criterion_train_losses(preds, targets, meta_info, self.opt_loss)
        elif mode == 'test':
            # TODO(synk): test mode needs torch.svd/torch.det (Procrustes PA-MPJPE)
            # and the external MANO joint_regressor asset; no clean Pallas equivalent.
            raise NotImplementedError
        else:
            raise KeyError

    __call__ = forward


# --------------------------------------------------------------------------
# Demo
# --------------------------------------------------------------------------

if __name__ == "__main__":
    BS, T, J = 2, 3, JOINT_NUM
    key = jax.random.PRNGKey(0)
    ks = jax.random.split(key, 16)

    def mask(k, shp, p=0.8):
        return (jax.random.uniform(k, shp) < p).astype(jnp.float32)

    targets = {
        'mano_pose': jax.random.normal(ks[0], (BS, T, 48), jnp.float32),
        'mano_shape': jax.random.normal(ks[1], (BS, T, 10), jnp.float32),
        'joint_cam': 0.1 * jax.random.normal(ks[2], (BS, T, J, 3), jnp.float32),
        'mano_joint_cam': 0.1 * jax.random.normal(ks[3], (BS, T, J, 3), jnp.float32),
        'joint_img': jax.random.uniform(ks[4], (BS, T, J, 3), jnp.float32) * 64.0,
    }
    meta_info = {
        'mano_pose_valid': mask(ks[5], (BS, T, 48)),
        'mano_shape_valid': mask(ks[6], (BS, T)),
        'joint_valid': mask(ks[7], (BS, T, J, 1)),
        'mano_joint_valid': mask(ks[8], (BS, T, J, 1)),
        'joint_trunc': mask(ks[9], (BS, T, J, 1)),
    }
    preds = {
        'pose': jax.random.normal(ks[10], (BS, T, 48), jnp.float32),
        'shape': jax.random.normal(ks[11], (BS, T, 10), jnp.float32),
        'joint_proj': jax.random.uniform(ks[12], (BS, T, J, 2), jnp.float32) * 64.0,
        'joint': 0.1 * jax.random.normal(ks[13], (BS, T, J, 3), jnp.float32),
        'joint_hm': jax.random.uniform(ks[14], (BS, T, J, 3), jnp.float32) * 64.0,
    }

    opt = {
        'task_parameters': {'num_k_select': 1},
        'train': {'loss': {'joint': 1.0, 'joint_proj': 1.0, 'joint_hm': 1.0}},
    }

    criterion = Criterion(opt)
    loss = criterion(preds, targets, meta_info, mode='train')
    for v in loss.values():
        jax.block_until_ready(v)
    print("KERNEL_OK")
</pallas_src>

<mosaic_0001>
module attributes {stable_mosaic.version = 11 : i64} {
  func.func @_fused_criterion_kernel(%arg0: i32, %arg1: i32, %arg2: memref<3x21x6xf32, #tpu.memory_space<vmem>>, %arg3: memref<3x21x6xf32, #tpu.memory_space<vmem>>, %arg4: memref<3x21x6xf32, #tpu.memory_space<vmem>>, %arg5: memref<21x6xf32, #tpu.memory_space<vmem>>, %arg6: memref<21x6xf32, #tpu.memory_space<vmem>>, %arg7: memref<2x21x6xf32, #tpu.memory_space<vmem>>, %arg8: memref<21x6xf32, #tpu.memory_space<vmem>>, %arg9: memref<3x21x6xf32, #tpu.memory_space<vmem>>, %arg10: memref<3x21x6xf32, #tpu.memory_space<vmem>>, %arg11: memref<48x6xf32, #tpu.memory_space<vmem>>, %arg12: memref<48x6xf32, #tpu.memory_space<vmem>>, %arg13: memref<48x6xf32, #tpu.memory_space<vmem>>, %arg14: memref<10x6xf32, #tpu.memory_space<vmem>>, %arg15: memref<10x6xf32, #tpu.memory_space<vmem>>, %arg16: memref<1x6xf32, #tpu.memory_space<vmem>>, %arg17: memref<1x8x128xf32, #tpu.memory_space<vmem>>) attributes {dimension_semantics = [#tpu.dimension_semantics<parallel>, #tpu.dimension_semantics<arbitrary>], iteration_bounds = array<i64: 1, 1>, scalar_prefetch = 0 : i64, scratch_operands = 0 : i64, tpu.core_type = #tpu.core_type<tc>, window_params = [{transform_indices = @transform_0, window_bounds = array<i64: 3, 21, 6>}, {transform_indices = @transform_1, window_bounds = array<i64: 3, 21, 6>}, {transform_indices = @transform_2, window_bounds = array<i64: 3, 21, 6>}, {transform_indices = @transform_3, window_bounds = array<i64: 21, 6>}, {transform_indices = @transform_4, window_bounds = array<i64: 21, 6>}, {transform_indices = @transform_5, window_bounds = array<i64: 2, 21, 6>}, {transform_indices = @transform_6, window_bounds = array<i64: 21, 6>}, {transform_indices = @transform_7, window_bounds = array<i64: 3, 21, 6>}, {transform_indices = @transform_8, window_bounds = array<i64: 3, 21, 6>}, {transform_indices = @transform_9, window_bounds = array<i64: 48, 6>}, {transform_indices = @transform_10, window_bounds = array<i64: 48, 6>}, {transform_indices = @transform_11, window_bounds = array<i64: 48, 6>}, {transform_indices = @transform_12, window_bounds = array<i64: 10, 6>}, {transform_indices = @transform_13, window_bounds = array<i64: 10, 6>}, {transform_indices = @transform_14, window_bounds = array<i64: 1, 6>}, {transform_indices = @transform_15, window_bounds = array<i64: 1, 8, 128>}]} {
    %c0_i32 = arith.constant 0 : i32
    %0 = arith.cmpi eq, %arg1, %c0_i32 : i32
    %1 = arith.extui %0 : i1 to i32
    %c0_i32_0 = arith.constant 0 : i32
    %2 = arith.cmpi ne, %1, %c0_i32_0 : i32
    scf.if %2 {
      %cst_77 = arith.constant 0.000000e+00 : f32
      %198 = vector.broadcast %cst_77 : f32 to vector<8x128xf32>
      %c0_78 = arith.constant 0 : index
      %c0_79 = arith.constant 0 : index
      %c0_80 = arith.constant 0 : index
      %199 = vector.load %arg17[%c0_78, %c0_79, %c0_80] : memref<1x8x128xf32, #tpu.memory_space<vmem>>, vector<1x8x128xf32>
      %200 = vector.shape_cast %199 : vector<1x8x128xf32> to vector<8x128xf32>
      %201 = vector.shape_cast %198 : vector<8x128xf32> to vector<1x8x128xf32>
      tpu.vector_store %arg17[%c0_78, %c0_79, %c0_80], %201 {strides = array<i32>} : memref<1x8x128xf32, #tpu.memory_space<vmem>>, vector<1x8x128xf32>,
    } else {
    }
    %c0 = arith.constant 0 : index
    %c0_1 = arith.constant 0 : index
    %c0_2 = arith.constant 0 : index
    %3 = vector.load %arg2[%c0, %c0_1, %c0_2] : memref<3x21x6xf32, #tpu.memory_space<vmem>>, vector<3x21x6xf32>
    %c0_3 = arith.constant 0 : index
    %c0_4 = arith.constant 0 : index
    %c0_5 = arith.constant 0 : index
    %4 = vector.load %arg3[%c0_3, %c0_4, %c0_5] : memref<3x21x6xf32, #tpu.memory_space<vmem>>, vector<3x21x6xf32>
    %c0_6 = arith.constant 0 : index
    %c0_7 = arith.constant 0 : index
    %c0_8 = arith.constant 0 : index
    %5 = vector.load %arg4[%c0_6, %c0_7, %c0_8] : memref<3x21x6xf32, #tpu.memory_space<vmem>>, vector<3x21x6xf32>
    %c0_9 = arith.constant 0 : index
    %c0_10 = arith.constant 0 : index
    %6 = vector.load %arg5[%c0_9, %c0_10] : memref<21x6xf32, #tpu.memory_space<vmem>>, vector<21x6xf32>
    %c0_11 = arith.constant 0 : index
    %c0_12 = arith.constant 0 : index
    %7 = vector.load %arg6[%c0_11, %c0_12] : memref<21x6xf32, #tpu.memory_space<vmem>>, vector<21x6xf32>
    %c0_13 = arith.constant 0 : index
    %c0_14 = arith.constant 0 : index
    %c0_15 = arith.constant 0 : index
    %8 = vector.load %arg7[%c0_13, %c0_14, %c0_15] : memref<2x21x6xf32, #tpu.memory_space<vmem>>, vector<2x21x6xf32>
    %c0_16 = arith.constant 0 : index
    %c0_17 = arith.constant 0 : index
    %9 = vector.load %arg8[%c0_16, %c0_17] : memref<21x6xf32, #tpu.memory_space<vmem>>, vector<21x6xf32>
    %c0_18 = arith.constant 0 : index
    %c0_19 = arith.constant 0 : index
    %c0_20 = arith.constant 0 : index
    %10 = vector.load %arg9[%c0_18, %c0_19, %c0_20] : memref<3x21x6xf32, #tpu.memory_space<vmem>>, vector<3x21x6xf32>
    %c0_21 = arith.constant 0 : index
    %c0_22 = arith.constant 0 : index
    %c0_23 = arith.constant 0 : index
    %11 = vector.load %arg10[%c0_21, %c0_22, %c0_23] : memref<3x21x6xf32, #tpu.memory_space<vmem>>, vector<3x21x6xf32>
    %12 = vector.extract_strided_slice %11 {offsets = [0, 0, 0], sizes = [2, 21, 6], strides = [1, 1, 1]} : vector<3x21x6xf32> to vector<2x21x6xf32>
    %c0_24 = arith.constant 0 : index
    %c0_25 = arith.constant 0 : index
    %13 = vector.load %arg11[%c0_24, %c0_25] : memref<48x6xf32, #tpu.memory_space<vmem>>, vector<48x6xf32>
    %c0_26 = arith.constant 0 : index
    %c0_27 = arith.constant 0 : index
    %14 = vector.load %arg12[%c0_26, %c0_27] : memref<48x6xf32, #tpu.memory_space<vmem>>, vector<48x6xf32>
    %c0_28 = arith.constant 0 : index
    %c0_29 = arith.constant 0 : index
    %15 = vector.load %arg13[%c0_28, %c0_29] : memref<48x6xf32, #tpu.memory_space<vmem>>, vector<48x6xf32>
    %c0_30 = arith.constant 0 : index
    %c0_31 = arith.constant 0 : index
    %16 = vector.load %arg14[%c0_30, %c0_31] : memref<10x6xf32, #tpu.memory_space<vmem>>, vector<10x6xf32>
    %c0_32 = arith.constant 0 : index
    %c0_33 = arith.constant 0 : index
    %17 = vector.load %arg15[%c0_32, %c0_33] : memref<10x6xf32, #tpu.memory_space<vmem>>, vector<10x6xf32>
    %c0_34 = arith.constant 0 : index
    %c0_35 = arith.constant 0 : index
    %18 = vector.load %arg16[%c0_34, %c0_35] : memref<1x6xf32, #tpu.memory_space<vmem>>, vector<1x6xf32>
    %cst = arith.constant 0.000000e+00 : f32
    %19 = vector.broadcast %cst : f32 to vector<21x6xf32>
    %20 = arith.cmpf ogt, %6, %19 : vector<21x6xf32>
    %21 = arith.subf %3, %4 : vector<3x21x6xf32>
    %22 = math.absf %21 : vector<3x21x6xf32>
    %23 = vector.shape_cast %6 : vector<21x6xf32> to vector<1x21x6xf32>
    %24 = vector.broadcast %23 : vector<1x21x6xf32> to vector<3x21x6xf32>
    %25 = arith.mulf %22, %24 : vector<3x21x6xf32>
    %cst_36 = arith.constant 0.000000e+00 : f32
    %26 = vector.shape_cast %20 : vector<21x6xi1> to vector<1x21x6xi1>
    %27 = vector.broadcast %26 : vector<1x21x6xi1> to vector<3x21x6xi1>
    %28 = vector.broadcast %cst_36 : f32 to vector<3x21x6xf32>
    %29 = arith.select %27, %25, %28 : vector<3x21x6xi1>, vector<3x21x6xf32>
    %30 = vector.shape_cast %29 : vector<3x21x6xf32> to vector<1x3x21x6xf32>
    %cst_37 = arith.constant dense<0.000000e+00> : vector<1xf32>
    %31 = vector.multi_reduction <add>, %30, %cst_37 [1, 2, 3] : vector<1x3x21x6xf32> to vector<1xf32>
    %32 = vector.shape_cast %31 : vector<1xf32> to vector<1x1x1x1xf32>
    %33 = vector.extract %32[0, 0, 0, 0] : f32 from vector<1x1x1x1xf32>
    %cst_38 = arith.constant 0.00264550257 : f32
    %34 = arith.mulf %cst_38, %33 : f32
    %cst_39 = arith.constant 0.000000e+00 : f32
    %35 = vector.broadcast %cst_39 : f32 to vector<21x6xf32>
    %36 = arith.cmpf ogt, %7, %35 : vector<21x6xf32>
    %37 = arith.subf %3, %5 : vector<3x21x6xf32>
    %38 = math.absf %37 : vector<3x21x6xf32>
    %39 = vector.shape_cast %7 : vector<21x6xf32> to vector<1x21x6xf32>
    %40 = vector.broadcast %39 : vector<1x21x6xf32> to vector<3x21x6xf32>
    %41 = arith.mulf %38, %40 : vector<3x21x6xf32>
    %cst_40 = arith.constant 0.000000e+00 : f32
    %42 = vector.shape_cast %36 : vector<21x6xi1> to vector<1x21x6xi1>
    %43 = vector.broadcast %42 : vector<1x21x6xi1> to vector<3x21x6xi1>
    %44 = vector.broadcast %cst_40 : f32 to vector<3x21x6xf32>
    %45 = arith.select %43, %41, %44 : vector<3x21x6xi1>, vector<3x21x6xf32>
    %46 = vector.shape_cast %45 : vector<3x21x6xf32> to vector<1x3x21x6xf32>
    %cst_41 = arith.constant dense<0.000000e+00> : vector<1xf32>
    %47 = vector.multi_reduction <add>, %46, %cst_41 [1, 2, 3] : vector<1x3x21x6xf32> to vector<1xf32>
    %48 = vector.shape_cast %47 : vector<1xf32> to vector<1x1x1x1xf32>
    %49 = vector.extract %48[0, 0, 0, 0] : f32 from vector<1x1x1x1xf32>
    %cst_42 = arith.constant 0.00264550257 : f32
    %50 = arith.mulf %cst_42, %49 : f32
    %cst_43 = arith.constant 0.000000e+00 : f32
    %51 = vector.broadcast %cst_43 : f32 to vector<21x6xf32>
    %52 = arith.cmpf ogt, %9, %51 : vector<21x6xf32>
    %53 = arith.subf %8, %12 : vector<2x21x6xf32>
    %54 = math.absf %53 : vector<2x21x6xf32>
    %55 = vector.shape_cast %9 : vector<21x6xf32> to vector<1x21x6xf32>
    %56 = vector.broadcast %55 : vector<1x21x6xf32> to vector<2x21x6xf32>
    %57 = arith.mulf %54, %56 : vector<2x21x6xf32>
    %cst_44 = arith.constant 0.000000e+00 : f32
    %58 = vector.shape_cast %52 : vector<21x6xi1> to vector<1x21x6xi1>
    %59 = vector.broadcast %58 : vector<1x21x6xi1> to vector<2x21x6xi1>
    %60 = vector.broadcast %cst_44 : f32 to vector<2x21x6xf32>
    %61 = arith.select %59, %57, %60 : vector<2x21x6xi1>, vector<2x21x6xf32>
    %62 = vector.shape_cast %61 : vector<2x21x6xf32> to vector<1x2x21x6xf32>
    %cst_45 = arith.constant dense<0.000000e+00> : vector<1xf32>
    %63 = vector.multi_reduction <add>, %62, %cst_45 [1, 2, 3] : vector<1x2x21x6xf32> to vector<1xf32>
    %64 = vector.shape_cast %63 : vector<1xf32> to vector<1x1x1x1xf32>
    %65 = vector.extract %64[0, 0, 0, 0] : f32 from vector<1x1x1x1xf32>
    %cst_46 = arith.constant 0.0039682542 : f32
    %66 = arith.mulf %cst_46, %65 : f32
    %cst_47 = arith.constant 0.000000e+00 : f32
    %67 = vector.broadcast %cst_47 : f32 to vector<21x6xf32>
    %68 = arith.cmpf ogt, %9, %67 : vector<21x6xf32>
    %69 = arith.subf %10, %11 : vector<3x21x6xf32>
    %70 = math.absf %69 : vector<3x21x6xf32>
    %71 = vector.shape_cast %9 : vector<21x6xf32> to vector<1x21x6xf32>
    %72 = vector.broadcast %71 : vector<1x21x6xf32> to vector<3x21x6xf32>
    %73 = arith.mulf %70, %72 : vector<3x21x6xf32>
    %cst_48 = arith.constant 0.000000e+00 : f32
    %74 = vector.shape_cast %68 : vector<21x6xi1> to vector<1x21x6xi1>
    %75 = vector.broadcast %74 : vector<1x21x6xi1> to vector<3x21x6xi1>
    %76 = vector.broadcast %cst_48 : f32 to vector<3x21x6xf32>
    %77 = arith.select %75, %73, %76 : vector<3x21x6xi1>, vector<3x21x6xf32>
    %78 = vector.shape_cast %77 : vector<3x21x6xf32> to vector<1x3x21x6xf32>
    %cst_49 = arith.constant dense<0.000000e+00> : vector<1xf32>
    %79 = vector.multi_reduction <add>, %78, %cst_49 [1, 2, 3] : vector<1x3x21x6xf32> to vector<1xf32>
    %80 = vector.shape_cast %79 : vector<1xf32> to vector<1x1x1x1xf32>
    %81 = vector.extract %80[0, 0, 0, 0] : f32 from vector<1x1x1x1xf32>
    %cst_50 = arith.constant 0.00264550257 : f32
    %82 = arith.mulf %cst_50, %81 : f32
    %cst_51 = arith.constant 0.000000e+00 : f32
    %83 = vector.broadcast %cst_51 : f32 to vector<48x6xf32>
    %84 = arith.cmpf ogt, %15, %83 : vector<48x6xf32>
    %85 = arith.subf %13, %14 : vector<48x6xf32>
    %86 = math.absf %85 : vector<48x6xf32>
    %87 = arith.mulf %86, %15 : vector<48x6xf32>
    %cst_52 = arith.constant 0.000000e+00 : f32
    %88 = vector.broadcast %cst_52 : f32 to vector<48x6xf32>
    %89 = arith.select %84, %87, %88 : vector<48x6xi1>, vector<48x6xf32>
    %90 = vector.shape_cast %89 : vector<48x6xf32> to vector<1x48x6xf32>
    %cst_53 = arith.constant dense<0.000000e+00> : vector<1xf32>
    %91 = vector.multi_reduction <add>, %90, %cst_53 [1, 2] : vector<1x48x6xf32> to vector<1xf32>
    %92 = vector.shape_cast %91 : vector<1xf32> to vector<1x1x1xf32>
    %93 = vector.extract %92[0, 0, 0] : f32 from vector<1x1x1xf32>
    %cst_54 = arith.constant 0.00347222225 : f32
    %94 = arith.mulf %cst_54, %93 : f32
    %cst_55 = arith.constant 0.000000e+00 : f32
    %95 = vector.broadcast %cst_55 : f32 to vector<1x6xf32>
    %96 = arith.cmpf ogt, %18, %95 : vector<1x6xf32>
    %97 = arith.subf %16, %17 : vector<10x6xf32>
    %98 = math.absf %97 : vector<10x6xf32>
    %99 = vector.broadcast %18 : vector<1x6xf32> to vector<10x6xf32>
    %100 = arith.mulf %98, %99 : vector<10x6xf32>
    %cst_56 = arith.constant 0.000000e+00 : f32
    %101 = vector.shape_cast %96 : vector<1x6xi1> to vector<1x6xi1>
    %102 = vector.broadcast %101 : vector<1x6xi1> to vector<10x6xi1>
    %103 = vector.broadcast %cst_56 : f32 to vector<10x6xf32>
    %104 = arith.select %102, %100, %103 : vector<10x6xi1>, vector<10x6xf32>
    %105 = vector.shape_cast %104 : vector<10x6xf32> to vector<1x10x6xf32>
    %cst_57 = arith.constant dense<0.000000e+00> : vector<1xf32>
    %106 = vector.multi_reduction <add>, %105, %cst_57 [1, 2] : vector<1x10x6xf32> to vector<1xf32>
    %107 = vector.shape_cast %106 : vector<1xf32> to vector<1x1x1xf32>
    %108 = vector.extract %107[0, 0, 0] : f32 from vector<1x1x1xf32>
    %cst_58 = arith.constant 0.0166666675 : f32
    %109 = arith.mulf %cst_58, %108 : f32
    %110 = arith.subf %3, %4 : vector<3x21x6xf32>
    %111 = vector.extract_strided_slice %110 {offsets = [0, 0, 0], sizes = [1, 21, 6], strides = [1, 1, 1]} : vector<3x21x6xf32> to vector<1x21x6xf32>
    %112 = vector.shape_cast %111 : vector<1x21x6xf32> to vector<21x6xf32>
    %113 = vector.extract_strided_slice %110 {offsets = [0, 0, 0], sizes = [1, 21, 6], strides = [1, 1, 1]} : vector<3x21x6xf32> to vector<1x21x6xf32>
    %114 = vector.shape_cast %113 : vector<1x21x6xf32> to vector<21x6xf32>
    %115 = arith.mulf %112, %114 : vector<21x6xf32>
    %116 = vector.extract_strided_slice %110 {offsets = [1, 0, 0], sizes = [1, 21, 6], strides = [1, 1, 1]} : vector<3x21x6xf32> to vector<1x21x6xf32>
    %117 = vector.shape_cast %116 : vector<1x21x6xf32> to vector<21x6xf32>
    %118 = vector.extract_strided_slice %110 {offsets = [1, 0, 0], sizes = [1, 21, 6], strides = [1, 1, 1]} : vector<3x21x6xf32> to vector<1x21x6xf32>
    %119 = vector.shape_cast %118 : vector<1x21x6xf32> to vector<21x6xf32>
    %120 = arith.mulf %117, %119 : vector<21x6xf32>
    %121 = arith.addf %115, %120 : vector<21x6xf32>
    %122 = vector.extract_strided_slice %110 {offsets = [2, 0, 0], sizes = [1, 21, 6], strides = [1, 1, 1]} : vector<3x21x6xf32> to vector<1x21x6xf32>
    %123 = vector.shape_cast %122 : vector<1x21x6xf32> to vector<21x6xf32>
    %124 = vector.extract_strided_slice %110 {offsets = [2, 0, 0], sizes = [1, 21, 6], strides = [1, 1, 1]} : vector<3x21x6xf32> to vector<1x21x6xf32>
    %125 = vector.shape_cast %124 : vector<1x21x6xf32> to vector<21x6xf32>
    %126 = arith.mulf %123, %125 : vector<21x6xf32>
    %127 = arith.addf %121, %126 : vector<21x6xf32>
    %128 = math.sqrt %127 : vector<21x6xf32>
    %cst_59 = arith.constant 1.000000e+03 : f32
    %129 = vector.broadcast %cst_59 : f32 to vector<21x6xf32>
    %130 = arith.mulf %128, %129 : vector<21x6xf32>
    %cst_60 = arith.constant 0.000000e+00 : f32
    %131 = vector.broadcast %cst_60 : f32 to vector<21x6xf32>
    %132 = arith.cmpf ogt, %6, %131 : vector<21x6xf32>
    %cst_61 = arith.constant 0.000000e+00 : f32
    %133 = vector.broadcast %cst_61 : f32 to vector<21x6xf32>
    %134 = arith.select %132, %130, %133 : vector<21x6xi1>, vector<21x6xf32>
    %cst_62 = arith.constant dense<0.000000e+00> : vector<6xf32>
    %135 = vector.multi_reduction <add>, %134, %cst_62 [0] : vector<21x6xf32> to vector<6xf32>
    %136 = vector.shape_cast %135 : vector<6xf32> to vector<1x6xf32>
    %137 = arith.extui %132 : vector<21x6xi1> to vector<21x6xi32>
    %138 = arith.sitofp %137 : vector<21x6xi32> to vector<21x6xf32>
    %cst_63 = arith.constant dense<0.000000e+00> : vector<6xf32>
    %139 = vector.multi_reduction <add>, %138, %cst_63 [0] : vector<21x6xf32> to vector<6xf32>
    %140 = vector.shape_cast %139 : vector<6xf32> to vector<1x6xf32>
    %cst_64 = arith.constant 0.000000e+00 : f32
    %141 = vector.broadcast %cst_64 : f32 to vector<1x6xf32>
    %142 = arith.cmpf ogt, %140, %141 : vector<1x6xf32>
    %cst_65 = arith.constant 1.000000e+00 : f32
    %143 = vector.broadcast %cst_65 : f32 to vector<1x6xf32>
    %144 = arith.select %142, %140, %143 : vector<1x6xi1>, vector<1x6xf32>
    %145 = arith.divf %136, %144 : vector<1x6xf32>
    %cst_66 = arith.constant 0.000000e+00 : f32
    %146 = vector.broadcast %cst_66 : f32 to vector<1x6xf32>
    %147 = arith.select %142, %145, %146 : vector<1x6xi1>, vector<1x6xf32>
    %148 = vector.shape_cast %147 : vector<1x6xf32> to vector<1x1x6xf32>
    %cst_67 = arith.constant dense<0.000000e+00> : vector<1xf32>
    %149 = vector.multi_reduction <add>, %148, %cst_67 [1, 2] : vector<1x1x6xf32> to vector<1xf32>
    %150 = vector.shape_cast %149 : vector<1xf32> to vector<1x1x1xf32>
    %151 = vector.extract %150[0, 0, 0] : f32 from vector<1x1x1xf32>
    %152 = arith.extui %142 : vector<1x6xi1> to vector<1x6xi32>
    %153 = arith.sitofp %152 : vector<1x6xi32> to vector<1x6xf32>
    %154 = vector.shape_cast %153 : vector<1x6xf32> to vector<1x1x6xf32>
    %cst_68 = arith.constant dense<0.000000e+00> : vector<1xf32>
    %155 = vector.multi_reduction <add>, %154, %cst_68 [1, 2] : vector<1x1x6xf32> to vector<1xf32>
    %156 = vector.shape_cast %155 : vector<1xf32> to vector<1x1x1xf32>
    %157 = vector.extract %156[0, 0, 0] : f32 from vector<1x1x1xf32>
    %158 = tpu.iota {dimensions = array<i32: 1>} : vector<8x128xi32>
    %cst_69 = arith.constant 0.000000e+00 : f32
    %159 = vector.broadcast %cst_69 : f32 to vector<8x128xf32>
    %c0_i32_70 = arith.constant 0 : i32
    %160 = vector.broadcast %c0_i32_70 : i32 to vector<8x128xi32>
    %161 = arith.cmpi eq, %158, %160 : vector<8x128xi32>
    %162 = vector.broadcast %34 : f32 to vector<8x128xf32>
    %163 = arith.select %161, %162, %159 : vector<8x128xi1>, vector<8x128xf32>
    %c1_i32 = arith.constant 1 : i32
    %164 = vector.broadcast %c1_i32 : i32 to vector<8x128xi32>
    %165 = arith.cmpi eq, %158, %164 : vector<8x128xi32>
    %166 = vector.broadcast %50 : f32 to vector<8x128xf32>
    %167 = arith.select %165, %166, %163 : vector<8x128xi1>, vector<8x128xf32>
    %c2_i32 = arith.constant 2 : i32
    %168 = vector.broadcast %c2_i32 : i32 to vector<8x128xi32>
    %169 = arith.cmpi eq, %158, %168 : vector<8x128xi32>
    %170 = vector.broadcast %66 : f32 to vector<8x128xf32>
    %171 = arith.select %169, %170, %167 : vector<8x128xi1>, vector<8x128xf32>
    %c3_i32 = arith.constant 3 : i32
    %172 = vector.broadcast %c3_i32 : i32 to vector<8x128xi32>
    %173 = arith.cmpi eq, %158, %172 : vector<8x128xi32>
    %174 = vector.broadcast %82 : f32 to vector<8x128xf32>
    %175 = arith.select %173, %174, %171 : vector<8x128xi1>, vector<8x128xf32>
    %c4_i32 = arith.constant 4 : i32
    %176 = vector.broadcast %c4_i32 : i32 to vector<8x128xi32>
    %177 = arith.cmpi eq, %158, %176 : vector<8x128xi32>
    %178 = vector.broadcast %94 : f32 to vector<8x128xf32>
    %179 = arith.select %177, %178, %175 : vector<8x128xi1>, vector<8x128xf32>
    %c5_i32 = arith.constant 5 : i32
    %180 = vector.broadcast %c5_i32 : i32 to vector<8x128xi32>
    %181 = arith.cmpi eq, %158, %180 : vector<8x128xi32>
    %182 = vector.broadcast %109 : f32 to vector<8x128xf32>
    %183 = arith.select %181, %182, %179 : vector<8x128xi1>, vector<8x128xf32>
    %c6_i32 = arith.constant 6 : i32
    %184 = vector.broadcast %c6_i32 : i32 to vector<8x128xi32>
    %185 = arith.cmpi eq, %158, %184 : vector<8x128xi32>
    %186 = vector.broadcast %151 : f32 to vector<8x128xf32>
    %187 = arith.select %185, %186, %183 : vector<8x128xi1>, vector<8x128xf32>
    %c7_i32 = arith.constant 7 : i32
    %188 = vector.broadcast %c7_i32 : i32 to vector<8x128xi32>
    %189 = arith.cmpi eq, %158, %188 : vector<8x128xi32>
    %190 = vector.broadcast %157 : f32 to vector<8x128xf32>
    %191 = arith.select %189, %190, %187 : vector<8x128xi1>, vector<8x128xf32>
    %c0_71 = arith.constant 0 : index
    %c0_72 = arith.constant 0 : index
    %c0_73 = arith.constant 0 : index
    %192 = vector.load %arg17[%c0_71, %c0_72, %c0_73] : memref<1x8x128xf32, #tpu.memory_space<vmem>>, vector<1x8x128xf32>
    %193 = vector.shape_cast %192 : vector<1x8x128xf32> to vector<8x128xf32>
    %194 = arith.addf %193, %191 : vector<8x128xf32>
    %c0_74 = arith.constant 0 : index
    %c0_75 = arith.constant 0 : index
    %c0_76 = arith.constant 0 : index
    %195 = vector.load %arg17[%c0_74, %c0_75, %c0_76] : memref<1x8x128xf32, #tpu.memory_space<vmem>>, vector<1x8x128xf32>
    %196 = vector.shape_cast %195 : vector<1x8x128xf32> to vector<8x128xf32>
    %197 = vector.shape_cast %194 : vector<8x128xf32> to vector<1x8x128xf32>
    tpu.vector_store %arg17[%c0_74, %c0_75, %c0_76], %197 {strides = array<i32>} : memref<1x8x128xf32, #tpu.memory_space<vmem>>, vector<1x8x128xf32>,
    return
  }
  func.func @transform_0(%arg0: i32, %arg1: i32) -> (i32, i32, i32) {
    %c1_i32 = arith.constant 1 : i32
    %0 = arith.muli %arg0, %c1_i32 : i32
    %1 = arith.addi %0, %arg1 : i32
    %c0_i32 = arith.constant 0 : i32
    %c0_i32_0 = arith.constant 0 : i32
    %c0_i32_1 = arith.constant 0 : i32
    return %c0_i32, %c0_i32_0, %1 : i32, i32, i32
  }
  func.func @transform_1(%arg0: i32, %arg1: i32) -> (i32, i32, i32) {
    %c1_i32 = arith.constant 1 : i32
    %0 = arith.muli %arg0, %c1_i32 : i32
    %1 = arith.addi %0, %arg1 : i32
    %c0_i32 = arith.constant 0 : i32
    %c0_i32_0 = arith.constant 0 : i32
    %c0_i32_1 = arith.constant 0 : i32
    return %c0_i32, %c0_i32_0, %1 : i32, i32, i32
  }
  func.func @transform_2(%arg0: i32, %arg1: i32) -> (i32, i32, i32) {
    %c1_i32 = arith.constant 1 : i32
    %0 = arith.muli %arg0, %c1_i32 : i32
    %1 = arith.addi %0, %arg1 : i32
    %c0_i32 = arith.constant 0 : i32
    %c0_i32_0 = arith.constant 0 : i32
    %c0_i32_1 = arith.constant 0 : i32
    return %c0_i32, %c0_i32_0, %1 : i32, i32, i32
  }
  func.func @transform_3(%arg0: i32, %arg1: i32) -> (i32, i32) {
    %c1_i32 = arith.constant 1 : i32
    %0 = arith.muli %arg0, %c1_i32 : i32
    %1 = arith.addi %0, %arg1 : i32
    %c0_i32 = arith.constant 0 : i32
    %c0_i32_0 = arith.constant 0 : i32
    return %c0_i32, %1 : i32, i32
  }
  func.func @transform_4(%arg0: i32, %arg1: i32) -> (i32, i32) {
    %c1_i32 = arith.constant 1 : i32
    %0 = arith.muli %arg0, %c1_i32 : i32
    %1 = arith.addi %0, %arg1 : i32
    %c0_i32 = arith.constant 0 : i32
    %c0_i32_0 = arith.constant 0 : i32
    return %c0_i32, %1 : i32, i32
  }
  func.func @transform_5(%arg0: i32, %arg1: i32) -> (i32, i32, i32) {
    %c1_i32 = arith.constant 1 : i32
    %0 = arith.muli %arg0, %c1_i32 : i32
    %1 = arith.addi %0, %arg1 : i32
    %c0_i32 = arith.constant 0 : i32
    %c0_i32_0 = arith.constant 0 : i32
    %c0_i32_1 = arith.constant 0 : i32
    return %c0_i32, %c0_i32_0, %1 : i32, i32, i32
  }
  func.func @transform_6(%arg0: i32, %arg1: i32) -> (i32, i32) {
    %c1_i32 = arith.constant 1 : i32
    %0 = arith.muli %arg0, %c1_i32 : i32
    %1 = arith.addi %0, %arg1 : i32
    %c0_i32 = arith.constant 0 : i32
    %c0_i32_0 = arith.constant 0 : i32
    return %c0_i32, %1 : i32, i32
  }
  func.func @transform_7(%arg0: i32, %arg1: i32) -> (i32, i32, i32) {
    %c1_i32 = arith.constant 1 : i32
    %0 = arith.muli %arg0, %c1_i32 : i32
    %1 = arith.addi %0, %arg1 : i32
    %c0_i32 = arith.constant 0 : i32
    %c0_i32_0 = arith.constant 0 : i32
    %c0_i32_1 = arith.constant 0 : i32
    return %c0_i32, %c0_i32_0, %1 : i32, i32, i32
  }
  func.func @transform_8(%arg0: i32, %arg1: i32) -> (i32, i32, i32) {
    %c1_i32 = arith.constant 1 : i32
    %0 = arith.muli %arg0, %c1_i32 : i32
    %1 = arith.addi %0, %arg1 : i32
    %c0_i32 = arith.constant 0 : i32
    %c0_i32_0 = arith.constant 0 : i32
    %c0_i32_1 = arith.constant 0 : i32
    return %c0_i32, %c0_i32_0, %1 : i32, i32, i32
  }
  func.func @transform_9(%arg0: i32, %arg1: i32) -> (i32, i32) {
    %c1_i32 = arith.constant 1 : i32
    %0 = arith.muli %arg0, %c1_i32 : i32
    %1 = arith.addi %0, %arg1 : i32
    %c0_i32 = arith.constant 0 : i32
    %c0_i32_0 = arith.constant 0 : i32
    return %c0_i32, %1 : i32, i32
  }
  func.func @transform_10(%arg0: i32, %arg1: i32) -> (i32, i32) {
    %c1_i32 = arith.constant 1 : i32
    %0 = arith.muli %arg0, %c1_i32 : i32
    %1 = arith.addi %0, %arg1 : i32
    %c0_i32 = arith.constant 0 : i32
    %c0_i32_0 = arith.constant 0 : i32
    return %c0_i32, %1 : i32, i32
  }
  func.func @transform_11(%arg0: i32, %arg1: i32) -> (i32, i32) {
    %c1_i32 = arith.constant 1 : i32
    %0 = arith.muli %arg0, %c1_i32 : i32
    %1 = arith.addi %0, %arg1 : i32
    %c0_i32 = arith.constant 0 : i32
    %c0_i32_0 = arith.constant 0 : i32
    return %c0_i32, %1 : i32, i32
  }
  func.func @transform_12(%arg0: i32, %arg1: i32) -> (i32, i32) {
    %c1_i32 = arith.constant 1 : i32
    %0 = arith.muli %arg0, %c1_i32 : i32
    %1 = arith.addi %0, %arg1 : i32
    %c0_i32 = arith.constant 0 : i32
    %c0_i32_0 = arith.constant 0 : i32
    return %c0_i32, %1 : i32, i32
  }
  func.func @transform_13(%arg0: i32, %arg1: i32) -> (i32, i32) {
    %c1_i32 = arith.constant 1 : i32
    %0 = arith.muli %arg0, %c1_i32 : i32
    %1 = arith.addi %0, %arg1 : i32
    %c0_i32 = arith.constant 0 : i32
    %c0_i32_0 = arith.constant 0 : i32
    return %c0_i32, %1 : i32, i32
  }
  func.func @transform_14(%arg0: i32, %arg1: i32) -> (i32, i32) {
    %c1_i32 = arith.constant 1 : i32
    %0 = arith.muli %arg0, %c1_i32 : i32
    %1 = arith.addi %0, %arg1 : i32
    %c0_i32 = arith.constant 0 : i32
    %c0_i32_0 = arith.constant 0 : i32
    return %c0_i32, %1 : i32, i32
  }
  func.func @transform_15(%arg0: i32, %arg1: i32) -> (i32, i32, i32) {
    %c0_i32 = arith.constant 0 : i32
    %c0_i32_0 = arith.constant 0 : i32
    %c0_i32_1 = arith.constant 0 : i32
    return %arg0, %c0_i32, %c0_i32_0 : i32, i32, i32
  }
}

</mosaic_0001>

<llo_original>
// kernel: tpu_custom_call.1
$region0: #{tpu_custom_call.1}
  #allocation0 [shape = 'u32[]', space=smem, size = 0x4, offset = 0x4, fixed_abs, tag = 'smem constant byte address 0x4 - core index']
  #allocation1 [shape = 'u32[72,128]{1,0:T(1,128)}', space=vmem, size = 0x9000, scoped, tag = 'internal scratch']
  %s0 = inlined_call_operand.vmem [shape: f32[3,21,6], index: 0, kind: input, shape index: {}]
  %s1 = inlined_call_operand.vmem [shape: f32[3,21,6], index: 1, kind: input, shape index: {}]
  %s2 = inlined_call_operand.vmem [shape: f32[3,21,6], index: 2, kind: input, shape index: {}]
  %s3 = inlined_call_operand.vmem [shape: f32[21,6], index: 3, kind: input, shape index: {}]
  %s4 = inlined_call_operand.vmem [shape: f32[21,6], index: 4, kind: input, shape index: {}]
  %s5 = inlined_call_operand.vmem [shape: f32[2,21,6], index: 5, kind: input, shape index: {}]
  %s6 = inlined_call_operand.vmem [shape: f32[21,6], index: 6, kind: input, shape index: {}]
  %s7 = inlined_call_operand.vmem [shape: f32[3,21,6], index: 7, kind: input, shape index: {}]
  %s8 = inlined_call_operand.vmem [shape: f32[3,21,6], index: 8, kind: input, shape index: {}]
  %s9 = inlined_call_operand.vmem [shape: f32[48,6], index: 9, kind: input, shape index: {}]
  %s10 = inlined_call_operand.vmem [shape: f32[48,6], index: 10, kind: input, shape index: {}]
  %s11 = inlined_call_operand.vmem [shape: f32[48,6], index: 11, kind: input, shape index: {}]
  %s12 = inlined_call_operand.vmem [shape: f32[10,6], index: 12, kind: input, shape index: {}]
  %s13 = inlined_call_operand.vmem [shape: f32[10,6], index: 13, kind: input, shape index: {}]
  %s14 = inlined_call_operand.vmem [shape: f32[1,6], index: 14, kind: input, shape index: {}]
  %s15 = inlined_call_operand.hbm [shape: f32[1,8,128], index: 15, kind: output, shape index: {}]
  %s16 = sld [smem:[#allocation0]]
  $region74: #{tpu_custom_call.1} parent=0
    _
  %s18 = ssub.s32 1, %s16
  %s19 = scalar_select 0, %s18, %s16
  $region1: #{tpu_custom_call.1} parent=0
    #allocation2 [shape = 'u8[4096]{0}', space=vmem, size = 0x1000, scoped, tag = 'output window, operand 0, single buffered']
    #allocation3 [shape = 's32[1]{0}', space=sflag, size = 0x4, scoped, tag = 'scoped memory for tpu_custom_call.1']
    %20 = vsyncpa [#allocation3], 0
    // Predicated region
    $region2: #{tpu_custom_call.1} parent=1 // pred_check
      _
    $region3: #{tpu_custom_call.1} parent=1 // pred_check_branch
      %22 = sbr.rel (0) target = $region5
    $region4: #{tpu_custom_call.1} parent=1 // pred_region
      %s23 = sadd.s32 0, 0
      %p24 = scmp.lt.s32.totalorder %s23, 0
      %s25 = scalar_select %p24, %s23, 0
      %s26 = smul.addr %s25, 8
      %s27 = scalar_lea.vmem %s0, %s26
      %s28 = sadd.s32 0, 0
    $region5: #{tpu_custom_call.1} parent=1 // pred_fallthru
      _
    // Predicated region
    $region6: #{tpu_custom_call.1} parent=1 // pred_check
      _
    $region7: #{tpu_custom_call.1} parent=1 // pred_check_branch
      %30 = sbr.rel (0) target = $region9
    $region8: #{tpu_custom_call.1} parent=1 // pred_region
      %s31 = sadd.s32 0, 0
      %p32 = scmp.lt.s32.totalorder %s31, 0
      %s33 = scalar_select %p32, %s31, 0
      %s34 = smul.addr %s33, 8
      %s35 = scalar_lea.vmem %s1, %s34
      %s36 = sadd.s32 0, 0
    $region9: #{tpu_custom_call.1} parent=1 // pred_fallthru
      _
    // Predicated region
    $region10: #{tpu_custom_call.1} parent=1 // pred_check
      _
    $region11: #{tpu_custom_call.1} parent=1 // pred_check_branch
      %38 = sbr.rel (0) target = $region13
    $region12: #{tpu_custom_call.1} parent=1 // pred_region
      %s39 = sadd.s32 0, 0
      %p40 = scmp.lt.s32.totalorder %s39, 0
      %s41 = scalar_select %p40, %s39, 0
      %s42 = smul.addr %s41, 8
      %s43 = scalar_lea.vmem %s2, %s42
      %s44 = sadd.s32 0, 0
    $region13: #{tpu_custom_call.1} parent=1 // pred_fallthru
      _
    // Predicated region
    $region14: #{tpu_custom_call.1} parent=1 // pred_check
      _
    $region15: #{tpu_custom_call.1} parent=1 // pred_check_branch
      %46 = sbr.rel (0) target = $region17
    $region16: #{tpu_custom_call.1} parent=1 // pred_region
      %s47 = sadd.s32 0, 0
      %p48 = scmp.lt.s32.totalorder %s47, 0
      %s49 = scalar_select %p48, %s47, 0
      %s50 = smul.addr %s49, 8
      %s51 = scalar_lea.vmem %s3, %s50
      %s52 = sadd.s32 0, 0
    $region17: #{tpu_custom_call.1} parent=1 // pred_fallthru
      _
    // Predicated region
    $region18: #{tpu_custom_call.1} parent=1 // pred_check
      _
    $region19: #{tpu_custom_call.1} parent=1 // pred_check_branch
      %54 = sbr.rel (0) target = $region21
    $region20: #{tpu_custom_call.1} parent=1 // pred_region
      %s55 = sadd.s32 0, 0
      %p56 = scmp.lt.s32.totalorder %s55, 0
      %s57 = scalar_select %p56, %s55, 0
      %s58 = smul.addr %s57, 8
      %s59 = scalar_lea.vmem %s4, %s58
      %s60 = sadd.s32 0, 0
    $region21: #{tpu_custom_call.1} parent=1 // pred_fallthru
      _
    // Predicated region
    $region22: #{tpu_custom_call.1} parent=1 // pred_check
      _
    $region23: #{tpu_custom_call.1} parent=1 // pred_check_branch
      %62 = sbr.rel (0) target = $region25
    $region24: #{tpu_custom_call.1} parent=1 // pred_region
      %s63 = sadd.s32 0, 0
      %p64 = scmp.lt.s32.totalorder %s63, 0
      %s65 = scalar_select %p64, %s63, 0
      %s66 = smul.addr %s65, 8
      %s67 = scalar_lea.vmem %s5, %s66
      %s68 = sadd.s32 0, 0
    $region25: #{tpu_custom_call.1} parent=1 // pred_fallthru
      _
    // Predicated region
    $region26: #{tpu_custom_call.1} parent=1 // pred_check
      _
    $region27: #{tpu_custom_call.1} parent=1 // pred_check_branch
      %70 = sbr.rel (0) target = $region29
    $region28: #{tpu_custom_call.1} parent=1 // pred_region
      %s71 = sadd.s32 0, 0
      %p72 = scmp.lt.s32.totalorder %s71, 0
      %s73 = scalar_select %p72, %s71, 0
      %s74 = smul.addr %s73, 8
      %s75 = scalar_lea.vmem %s6, %s74
      %s76 = sadd.s32 0, 0
    $region29: #{tpu_custom_call.1} parent=1 // pred_fallthru
      _
    // Predicated region
    $region30: #{tpu_custom_call.1} parent=1 // pred_check
      _
    $region31: #{tpu_custom_call.1} parent=1 // pred_check_branch
      %78 = sbr.rel (0) target = $region33
    $region32: #{tpu_custom_call.1} parent=1 // pred_region
      %s79 = sadd.s32 0, 0
      %p80 = scmp.lt.s32.totalorder %s79, 0
      %s81 = scalar_select %p80, %s79, 0
      %s82 = smul.addr %s81, 8
      %s83 = scalar_lea.vmem %s7, %s82
      %s84 = sadd.s32 0, 0
    $region33: #{tpu_custom_call.1} parent=1 // pred_fallthru
      _
    // Predicated region
    $region34: #{tpu_custom_call.1} parent=1 // pred_check
      _
    $region35: #{tpu_custom_call.1} parent=1 // pred_check_branch
      %86 = sbr.rel (0) target = $region37
    $region36: #{tpu_custom_call.1} parent=1 // pred_region
      %s87 = sadd.s32 0, 0
      %p88 = scmp.lt.s32.totalorder %s87, 0
      %s89 = scalar_select %p88, %s87, 0
      %s90 = smul.addr %s89, 8
      %s91 = scalar_lea.vmem %s8, %s90
      %s92 = sadd.s32 0, 0
    $region37: #{tpu_custom_call.1} parent=1 // pred_fallthru
      _
    // Predicated region
    $region38: #{tpu_custom_call.1} parent=1 // pred_check
      _
    $region39: #{tpu_custom_call.1} parent=1 // pred_check_branch
      %94 = sbr.rel (0) target = $region41
    $region40: #{tpu_custom_call.1} parent=1 // pred_region
      %s95 = sadd.s32 0, 0
      %p96 = scmp.lt.s32.totalorder %s95, 0
      %s97 = scalar_select %p96, %s95, 0
      %s98 = smul.addr %s97, 8
      %s99 = scalar_lea.vmem %s9, %s98
      %s100 = sadd.s32 0, 0
    $region41: #{tpu_custom_call.1} parent=1 // pred_fallthru
      _
    // Predicated region
    $region42: #{tpu_custom_call.1} parent=1 // pred_check
      _
    $region43: #{tpu_custom_call.1} parent=1 // pred_check_branch
      %102 = sbr.rel (0) target = $region45
    $region44: #{tpu_custom_call.1} parent=1 // pred_region
      %s103 = sadd.s32 0, 0
      %p104 = scmp.lt.s32.totalorder %s103, 0
      %s105 = scalar_select %p104, %s103, 0
      %s106 = smul.addr %s105, 8
      %s107 = scalar_lea.vmem %s10, %s106
      %s108 = sadd.s32 0, 0
    $region45: #{tpu_custom_call.1} parent=1 // pred_fallthru
      _
    // Predicated region
    $region46: #{tpu_custom_call.1} parent=1 // pred_check
      _
    $region47: #{tpu_custom_call.1} parent=1 // pred_check_branch
      %110 = sbr.rel (0) target = $region49
    $region48: #{tpu_custom_call.1} parent=1 // pred_region
      %s111 = sadd.s32 0, 0
      %p112 = scmp.lt.s32.totalorder %s111, 0
      %s113 = scalar_select %p112, %s111, 0
      %s114 = smul.addr %s113, 8
      %s115 = scalar_lea.vmem %s11, %s114
      %s116 = sadd.s32 0, 0
    $region49: #{tpu_custom_call.1} parent=1 // pred_fallthru
      _
    // Predicated region
    $region50: #{tpu_custom_call.1} parent=1 // pred_check
      _
    $region51: #{tpu_custom_call.1} parent=1 // pred_check_branch
      %118 = sbr.rel (0) target = $region53
    $region52: #{tpu_custom_call.1} parent=1 // pred_region
      %s119 = sadd.s32 0, 0
      %p120 = scmp.lt.s32.totalorder %s119, 0
      %s121 = scalar_select %p120, %s119, 0
      %s122 = smul.addr %s121, 8
      %s123 = scalar_lea.vmem %s12, %s122
      %s124 = sadd.s32 0, 0
    $region53: #{tpu_custom_call.1} parent=1 // pred_fallthru
      _
    // Predicated region
    $region54: #{tpu_custom_call.1} parent=1 // pred_check
      _
    $region55: #{tpu_custom_call.1} parent=1 // pred_check_branch
      %126 = sbr.rel (0) target = $region57
    $region56: #{tpu_custom_call.1} parent=1 // pred_region
      %s127 = sadd.s32 0, 0
      %p128 = scmp.lt.s32.totalorder %s127, 0
      %s129 = scalar_select %p128, %s127, 0
      %s130 = smul.addr %s129, 8
      %s131 = scalar_lea.vmem %s13, %s130
      %s132 = sadd.s32 0, 0
    $region57: #{tpu_custom_call.1} parent=1 // pred_fallthru
      _
    // Predicated region
    $region58: #{tpu_custom_call.1} parent=1 // pred_check
      _
    $region59: #{tpu_custom_call.1} parent=1 // pred_check_branch
      %134 = sbr.rel (0) target = $region61
    $region60: #{tpu_custom_call.1} parent=1 // pred_region
      %s135 = sadd.s32 0, 0
      %p136 = scmp.lt.s32.totalorder %s135, 0
      %s137 = scalar_select %p136, %s135, 0
      %s138 = scalar_lea.vmem %s14, %s137
      %s139 = sadd.s32 0, 0
    $region61: #{tpu_custom_call.1} parent=1 // pred_fallthru
      _
    %s140 = sadd.s32 0, 0
    %p141 = scmp.lt.s32.totalorder %s140, 0
    %s142 = scalar_select %p141, %s140, 0
    %s143 = smul.addr %s142, 8
    %s144 = scalar_lea.vmem %s0, %s143
    %s145 = sadd.s32 0, 0
    %p146 = scmp.lt.s32.totalorder %s145, 0
    %s147 = scalar_select %p146, %s145, 0
    %s148 = smul.addr %s147, 8
    %s149 = scalar_lea.vmem %s1, %s148
    %s150 = sadd.s32 0, 0
    %p151 = scmp.lt.s32.totalorder %s150, 0
    %s152 = scalar_select %p151, %s150, 0
    %s153 = smul.addr %s152, 8
    %s154 = scalar_lea.vmem %s2, %s153
    %s155 = sadd.s32 0, 0
    %p156 = scmp.lt.s32.totalorder %s155, 0
    %s157 = scalar_select %p156, %s155, 0
    %s158 = smul.addr %s157, 8
    %s159 = scalar_lea.vmem %s3, %s158
    %s160 = sadd.s32 0, 0
    %p161 = scmp.lt.s32.totalorder %s160, 0
    %s162 = scalar_select %p161, %s160, 0
    %s163 = smul.addr %s162, 8
    %s164 = scalar_lea.vmem %s4, %s163
    %s165 = sadd.s32 0, 0
    %p166 = scmp.lt.s32.totalorder %s165, 0
    %s167 = scalar_select %p166, %s165, 0
    %s168 = smul.addr %s167, 8
    %s169 = scalar_lea.vmem %s5, %s168
    %s170 = sadd.s32 0, 0
    %p171 = scmp.lt.s32.totalorder %s170, 0
    %s172 = scalar_select %p171, %s170, 0
    %s173 = smul.addr %s172, 8
    %s174 = scalar_lea.vmem %s6, %s173
    %s175 = sadd.s32 0, 0
    %p176 = scmp.lt.s32.totalorder %s175, 0
    %s177 = scalar_select %p176, %s175, 0
    %s178 = smul.addr %s177, 8
    %s179 = scalar_lea.vmem %s7, %s178
    %s180 = sadd.s32 0, 0
    %p181 = scmp.lt.s32.totalorder %s180, 0
    %s182 = scalar_select %p181, %s180, 0
    %s183 = smul.addr %s182, 8
    %s184 = scalar_lea.vmem %s8, %s183
    %s185 = sadd.s32 0, 0
    %p186 = scmp.lt.s32.totalorder %s185, 0
    %s187 = scalar_select %p186, %s185, 0
    %s188 = smul.addr %s187, 8
    %s189 = scalar_lea.vmem %s9, %s188
    %s190 = sadd.s32 0, 0
    %p191 = scmp.lt.s32.totalorder %s190, 0
    %s192 = scalar_select %p191, %s190, 0
    %s193 = smul.addr %s192, 8
    %s194 = scalar_lea.vmem %s10, %s193
    %s195 = sadd.s32 0, 0
    %p196 = scmp.lt.s32.totalorder %s195, 0
    %s197 = scalar_select %p196, %s195, 0
    %s198 = smul.addr %s197, 8
    %s199 = scalar_lea.vmem %s11, %s198
    %s200 = sadd.s32 0, 0
    %p201 = scmp.lt.s32.totalorder %s200, 0
    %s202 = scalar_select %p201, %s200, 0
    %s203 = smul.addr %s202, 8
    %s204 = scalar_lea.vmem %s12, %s203
    %s205 = sadd.s32 0, 0
    %p206 = scmp.lt.s32.totalorder %s205, 0
    %s207 = scalar_select %p206, %s205, 0
    %s208 = smul.addr %s207, 8
    %s209 = scalar_lea.vmem %s13, %s208
    %s210 = sadd.s32 0, 0
    %p211 = scmp.lt.s32.totalorder %s210, 0
    %s212 = scalar_select %p211, %s210, 0
    %s213 = scalar_lea.vmem %s14, %s212
    %s214 = sadd.s32 0, 0
    %p215 = scmp.lt.s32.totalorder %s214, 0
    %s216 = scalar_select %p215, %s214, 0
    %s217 = smul.addr %s216, 8
    %s218 = scalar_lea.vmem %s0, %s217
    %s219 = sadd.s32 0, 0
    %s220 = sadd.s32 0, 0
    %p221 = scmp.lt.s32.totalorder %s220, 0
    %s222 = scalar_select %p221, %s220, 0
    %s223 = smul.addr %s222, 8
    %s224 = scalar_lea.vmem %s1, %s223
    %s225 = sadd.s32 0, 0
    %s226 = sadd.s32 0, 0
    %p227 = scmp.lt.s32.totalorder %s226, 0
    %s228 = scalar_select %p227, %s226, 0
    %s229 = smul.addr %s228, 8
    %s230 = scalar_lea.vmem %s2, %s229
    %s231 = sadd.s32 0, 0
    %s232 = sadd.s32 0, 0
    %p233 = scmp.lt.s32.totalorder %s232, 0
    %s234 = scalar_select %p233, %s232, 0
    %s235 = smul.addr %s234, 8
    %s236 = scalar_lea.vmem %s3, %s235
    %s237 = sadd.s32 0, 0
    %s238 = sadd.s32 0, 0
    %p239 = scmp.lt.s32.totalorder %s238, 0
    %s240 = scalar_select %p239, %s238, 0
    %s241 = smul.addr %s240, 8
    %s242 = scalar_lea.vmem %s4, %s241
    %s243 = sadd.s32 0, 0
    %s244 = sadd.s32 0, 0
    %p245 = scmp.lt.s32.totalorder %s244, 0
    %s246 = scalar_select %p245, %s244, 0
    %s247 = smul.addr %s246, 8
    %s248 = scalar_lea.vmem %s5, %s247
    %s249 = sadd.s32 0, 0
    %s250 = sadd.s32 0, 0
    %p251 = scmp.lt.s32.totalorder %s250, 0
    %s252 = scalar_select %p251, %s250, 0
    %s253 = smul.addr %s252, 8
    %s254 = scalar_lea.vmem %s6, %s253
    %s255 = sadd.s32 0, 0
    %s256 = sadd.s32 0, 0
    %p257 = scmp.lt.s32.totalorder %s256, 0
    %s258 = scalar_select %p257, %s256, 0
    %s259 = smul.addr %s258, 8
    %s260 = scalar_lea.vmem %s7, %s259
    %s261 = sadd.s32 0, 0
    %s262 = sadd.s32 0, 0
    %p263 = scmp.lt.s32.totalorder %s262, 0
    %s264 = scalar_select %p263, %s262, 0
    %s265 = smul.addr %s264, 8
    %s266 = scalar_lea.vmem %s8, %s265
    %s267 = sadd.s32 0, 0
    %s268 = sadd.s32 0, 0
    %p269 = scmp.lt.s32.totalorder %s268, 0
    %s270 = scalar_select %p269, %s268, 0
    %s271 = smul.addr %s270, 8
    %s272 = scalar_lea.vmem %s9, %s271
    %s273 = sadd.s32 0, 0
    %s274 = sadd.s32 0, 0
    %p275 = scmp.lt.s32.totalorder %s274, 0
    %s276 = scalar_select %p275, %s274, 0
    %s277 = smul.addr %s276, 8
    %s278 = scalar_lea.vmem %s10, %s277
    %s279 = sadd.s32 0, 0
    %s280 = sadd.s32 0, 0
    %p281 = scmp.lt.s32.totalorder %s280, 0
    %s282 = scalar_select %p281, %s280, 0
    %s283 = smul.addr %s282, 8
    %s284 = scalar_lea.vmem %s11, %s283
    %s285 = sadd.s32 0, 0
    %s286 = sadd.s32 0, 0
    %p287 = scmp.lt.s32.totalorder %s286, 0
    %s288 = scalar_select %p287, %s286, 0
    %s289 = smul.addr %s288, 8
    %s290 = scalar_lea.vmem %s12, %s289
    %s291 = sadd.s32 0, 0
    %s292 = sadd.s32 0, 0
    %p293 = scmp.lt.s32.totalorder %s292, 0
    %s294 = scalar_select %p293, %s292, 0
    %s295 = smul.addr %s294, 8
    %s296 = scalar_lea.vmem %s13, %s295
    %s297 = sadd.s32 0, 0
    %s298 = sadd.s32 0, 0
    %p299 = scmp.lt.s32.totalorder %s298, 0
    %s300 = scalar_select %p299, %s298, 0
    %s301 = scalar_lea.vmem %s14, %s300
    %s302 = sadd.s32 0, 0
    %p303 = scmp.eq.s32.totalorder 0, 0
    // Predicated region
    $region62: #{tpu_custom_call.1} parent=1 // pred_check
      %p304 = pneg %p303
    $region63: #{tpu_custom_call.1} parent=1 // pred_check_branch
      %306 = sbr.rel (%p304) target = $region65
    $region64: #{tpu_custom_call.1} parent=1 // pred_region
      %307 = vst [vmem:[#allocation2] sm:$0xff] 0.0
    $region65: #{tpu_custom_call.1} parent=1 // pred_fallthru
      _
    %v308 = vld [vmem:[%s218] sm:$0xff]
    %v309 = vld [vmem:[%s218 + $0x8] sm:$0xff]
    %v310 = vld [vmem:[%s218 + $0x10] sm:$0x1f]
    %v311 = vld [vmem:[%s218 + $0x18] sm:$0xff]
    %v312 = vld [vmem:[%s218 + $0x20] sm:$0xff]
    %v313 = vld [vmem:[%s218 + $0x28] sm:$0x1f]
    %v314 = vld [vmem:[%s218 + $0x30] sm:$0xff]
    %v315 = vld [vmem:[%s218 + $0x38] sm:$0xff]
    %v316 = vld [vmem:[%s218 + $0x40] sm:$0x1f]
    %v317 = vld [vmem:[%s224] sm:$0xff]
    %v318 = vld [vmem:[%s224 + $0x8] sm:$0xff]
    %v319 = vld [vmem:[%s224 + $0x10] sm:$0x1f]
    %v320 = vld [vmem:[%s224 + $0x18] sm:$0xff]
    %v321 = vld [vmem:[%s224 + $0x20] sm:$0xff]
    %v322 = vld [vmem:[%s224 + $0x28] sm:$0x1f]
    %v323 = vld [vmem:[%s224 + $0x30] sm:$0xff]
    %v324 = vld [vmem:[%s224 + $0x38] sm:$0xff]
    %v325 = vld [vmem:[%s224 + $0x40] sm:$0x1f]
    %v326 = vld [vmem:[%s230] sm:$0xff]
    %v327 = vld [vmem:[%s230 + $0x8] sm:$0xff]
    %v328 = vld [vmem:[%s230 + $0x10] sm:$0x1f]
    %v329 = vld [vmem:[%s230 + $0x18] sm:$0xff]
    %v330 = vld [vmem:[%s230 + $0x20] sm:$0xff]
    %v331 = vld [vmem:[%s230 + $0x28] sm:$0x1f]
    %v332 = vld [vmem:[%s230 + $0x30] sm:$0xff]
    %v333 = vld [vmem:[%s230 + $0x38] sm:$0xff]
    %v334 = vld [vmem:[%s230 + $0x40] sm:$0x1f]
    %v335 = vld [vmem:[%s236] sm:$0xff]
    %v336 = vld [vmem:[%s236 + $0x8] sm:$0xff]
    %v337 = vld [vmem:[%s236 + $0x10] sm:$0x1f]
    %v338 = vld [vmem:[%s242] sm:$0xff]
    %v339 = vld [vmem:[%s242 + $0x8] sm:$0xff]
    %v340 = vld [vmem:[%s242 + $0x10] sm:$0x1f]
    %v341 = vld [vmem:[%s248] sm:$0xff]
    %v342 = vld [vmem:[%s248 + $0x8] sm:$0xff]
    %v343 = vld [vmem:[%s248 + $0x10] sm:$0x1f]
    %v344 = vld [vmem:[%s248 + $0x18] sm:$0xff]
    %v345 = vld [vmem:[%s248 + $0x20] sm:$0xff]
    %v346 = vld [vmem:[%s248 + $0x28] sm:$0x1f]
    %v347 = vld [vmem:[%s254] sm:$0xff]
    %v348 = vld [vmem:[%s254 + $0x8] sm:$0xff]
    %v349 = vld [vmem:[%s254 + $0x10] sm:$0x1f]
    %v350 = vld [vmem:[%s260] sm:$0xff]
    %v351 = vld [vmem:[%s260 + $0x8] sm:$0xff]
    %v352 = vld [vmem:[%s260 + $0x10] sm:$0x1f]
    %v353 = vld [vmem:[%s260 + $0x18] sm:$0xff]
    %v354 = vld [vmem:[%s260 + $0x20] sm:$0xff]
    %v355 = vld [vmem:[%s260 + $0x28] sm:$0x1f]
    %v356 = vld [vmem:[%s260 + $0x30] sm:$0xff]
    %v357 = vld [vmem:[%s260 + $0x38] sm:$0xff]
    %v358 = vld [vmem:[%s260 + $0x40] sm:$0x1f]
    %v359 = vld [vmem:[%s266] sm:$0xff]
    %v360 = vld [vmem:[%s266 + $0x8] sm:$0xff]
    %v361 = vld [vmem:[%s266 + $0x10] sm:$0x1f]
    %v362 = vld [vmem:[%s266 + $0x18] sm:$0xff]
    %v363 = vld [vmem:[%s266 + $0x20] sm:$0xff]
    %v364 = vld [vmem:[%s266 + $0x28] sm:$0x1f]
    %v365 = vld [vmem:[%s266 + $0x30] sm:$0xff]
    %v366 = vld [vmem:[%s266 + $0x38] sm:$0xff]
    %v367 = vld [vmem:[%s266 + $0x40] sm:$0x1f]
    %v368 = vld [vmem:[%s272] sm:$0xff]
    %v369 = vld [vmem:[%s272 + $0x8] sm:$0xff]
    %v370 = vld [vmem:[%s272 + $0x10] sm:$0xff]
    %v371 = vld [vmem:[%s272 + $0x18] sm:$0xff]
    %v372 = vld [vmem:[%s272 + $0x20] sm:$0xff]
    %v373 = vld [vmem:[%s272 + $0x28] sm:$0xff]
    %v374 = vld [vmem:[%s278] sm:$0xff]
    %v375 = vld [vmem:[%s278 + $0x8] sm:$0xff]
    %v376 = vld [vmem:[%s278 + $0x10] sm:$0xff]
    %v377 = vld [vmem:[%s278 + $0x18] sm:$0xff]
    %v378 = vld [vmem:[%s278 + $0x20] sm:$0xff]
    %v379 = vld [vmem:[%s278 + $0x28] sm:$0xff]
    %v380 = vld [vmem:[%s284] sm:$0xff]
    %v381 = vld [vmem:[%s284 + $0x8] sm:$0xff]
    %v382 = vld [vmem:[%s284 + $0x10] sm:$0xff]
    %v383 = vld [vmem:[%s284 + $0x18] sm:$0xff]
    %v384 = vld [vmem:[%s284 + $0x20] sm:$0xff]
    %v385 = vld [vmem:[%s284 + $0x28] sm:$0xff]
    %v386 = vld [vmem:[%s290] sm:$0xff]
    %v387 = vld [vmem:[%s290 + $0x8] sm:$0x3]
    %v388 = vld [vmem:[%s296] sm:$0xff]
    %v389 = vld [vmem:[%s296 + $0x8] sm:$0x3]
    %v390 = vld [vmem:[%s301] sm:$0x1]
    %vm391 = vcmp.gt.f32.partialorder %v335, 0.0
    %vm392 = vcmp.gt.f32.partialorder %v336, 0.0
    %vm393 = vcmp.gt.f32.partialorder %v337, 0.0
    %v394 = vsub.f32 %v308, %v317
    %v395 = vsub.f32 %v309, %v318
    %v396 = vsub.f32 %v310, %v319
    %v397 = vsub.f32 %v311, %v320
    %v398 = vsub.f32 %v312, %v321
    %v399 = vsub.f32 %v313, %v322
    %v400 = vsub.f32 %v314, %v323
    %v401 = vsub.f32 %v315, %v324
    %v402 = vsub.f32 %v316, %v325
    %v403 = vand.u32 2147483647, %v394
    %v404 = vand.u32 2147483647, %v395
    %v405 = vand.u32 2147483647, %v396
    %v406 = vand.u32 2147483647, %v397
    %v407 = vand.u32 2147483647, %v398
    %v408 = vand.u32 2147483647, %v399
    %v409 = vand.u32 2147483647, %v400
    %v410 = vand.u32 2147483647, %v401
    %v411 = vand.u32 2147483647, %v402
    %v412 = vmul.f32 %v403, %v335
    %v413 = vmul.f32 %v404, %v336
    %v414 = vmul.f32 %v405, %v337
    %v415 = vmul.f32 %v406, %v335
    %v416 = vmul.f32 %v407, %v336
    %v417 = vmul.f32 %v408, %v337
    %v418 = vmul.f32 %v409, %v335
    %v419 = vmul.f32 %v410, %v336
    %v420 = vmul.f32 %v411, %v337
    %v421 = vsel %vm391, 1, 0
    %v422 = vsel %vm392, 1, 0
    %v423 = vsel %vm393, 1, 0
    %vm424 = vcmp.eq.s32.totalorder %v421, 1
    %vm425 = vcmp.eq.s32.totalorder %v422, 1
    %vm426 = vcmp.eq.s32.totalorder %v423, 1
    %v427 = vsel %vm424, %v412, 0.0
    %v428 = vsel %vm425, %v413, 0.0
    %v429 = vsel %vm426, %v414, 0.0
    %v430 = vsel %vm424, %v415, 0.0
    %v431 = vsel %vm425, %v416, 0.0
    %v432 = vsel %vm426, %v417, 0.0
    %v433 = vsel %vm424, %v418, 0.0
    %v434 = vsel %vm425, %v419, 0.0
    %v435 = vsel %vm426, %v420, 0.0
    %vm436 = vcmask 48128
    %v437 = vsel %vm436, %v427, 0.0
    %v438 = vsel %vm436, %v428, 0.0
    %v439 = vadd.f32 %v437, %v438
    %vm440 = vcmask 45056
    %v441 = vsel %vm440, %v429, 0.0
    %v442 = vadd.f32 %v439, %v441
    %v443 = vsel %vm436, %v430, 0.0
    %v444 = vadd.f32 %v442, %v443
    %v445 = vsel %vm436, %v431, 0.0
    %v446 = vadd.f32 %v444, %v445
    %v447 = vsel %vm440, %v432, 0.0
    %v448 = vadd.f32 %v446, %v447
    %v449 = vsel %vm436, %v433, 0.0
    %v450 = vadd.f32 %v448, %v449
    %v451 = vsel %vm436, %v434, 0.0
    %v452 = vadd.f32 %v450, %v451
    %v453 = vsel %vm440, %v435, 0.0
    %v454 = vadd.f32 %v452, %v453
    %455 = vadd.xlane.f32.xlu0 %v454
    %v456 = vpop.xlane.xlu0 %455
    %v457 = vrot.slane %v456, 4
    %v458 = vadd.f32 %v456, %v457
    %v459 = vrot.slane %v458, 2
    %v460 = vadd.f32 %v458, %v459
    %v461 = vrot.slane %v460, 1
    %v462 = vadd.f32 %v460, %v461
    %s463 = vtos %v462
    %s464 = smul.f32 %s463, 0.0026455026
    %vm465 = vcmp.gt.f32.partialorder %v338, 0.0
    %vm466 = vcmp.gt.f32.partialorder %v339, 0.0
    %vm467 = vcmp.gt.f32.partialorder %v340, 0.0
    %v468 = vsub.f32 %v308, %v326
    %v469 = vsub.f32 %v309, %v327
    %v470 = vsub.f32 %v310, %v328
    %v471 = vsub.f32 %v311, %v329
    %v472 = vsub.f32 %v312, %v330
    %v473 = vsub.f32 %v313, %v331
    %v474 = vsub.f32 %v314, %v332
    %v475 = vsub.f32 %v315, %v333
    %v476 = vsub.f32 %v316, %v334
    %v477 = vand.u32 2147483647, %v468
    %v478 = vand.u32 2147483647, %v469
    %v479 = vand.u32 2147483647, %v470
    %v480 = vand.u32 2147483647, %v471
    %v481 = vand.u32 2147483647, %v472
    %v482 = vand.u32 2147483647, %v473
    %v483 = vand.u32 2147483647, %v474
    %v484 = vand.u32 2147483647, %v475
    %v485 = vand.u32 2147483647, %v476
    %v486 = vmul.f32 %v477, %v338
    %v487 = vmul.f32 %v478, %v339
    %v488 = vmul.f32 %v479, %v340
    %v489 = vmul.f32 %v480, %v338
    %v490 = vmul.f32 %v481, %v339
    %v491 = vmul.f32 %v482, %v340
    %v492 = vmul.f32 %v483, %v338
    %v493 = vmul.f32 %v484, %v339
    %v494 = vmul.f32 %v485, %v340
    %v495 = vsel %vm465, 1, 0
    %v496 = vsel %vm466, 1, 0
    %v497 = vsel %vm467, 1, 0
    %vm498 = vcmp.eq.s32.totalorder %v495, 1
    %vm499 = vcmp.eq.s32.totalorder %v496, 1
    %vm500 = vcmp.eq.s32.totalorder %v497, 1
    %v501 = vsel %vm498, %v486, 0.0
    %v502 = vsel %vm499, %v487, 0.0
    %v503 = vsel %vm500, %v488, 0.0
    %v504 = vsel %vm498, %v489, 0.0
    %v505 = vsel %vm499, %v490, 0.0
    %v506 = vsel %vm500, %v491, 0.0
    %v507 = vsel %vm498, %v492, 0.0
    %v508 = vsel %vm499, %v493, 0.0
    %v509 = vsel %vm500, %v494, 0.0
    %v510 = vsel %vm436, %v501, 0.0
    %v511 = vsel %vm436, %v502, 0.0
    %v512 = vadd.f32 %v510, %v511
    %v513 = vsel %vm440, %v503, 0.0
    %v514 = vadd.f32 %v512, %v513
    %v515 = vsel %vm436, %v504, 0.0
    %v516 = vadd.f32 %v514, %v515
    %v517 = vsel %vm436, %v505, 0.0
    %v518 = vadd.f32 %v516, %v517
    %v519 = vsel %vm440, %v506, 0.0
    %v520 = vadd.f32 %v518, %v519
    %v521 = vsel %vm436, %v507, 0.0
    %v522 = vadd.f32 %v520, %v521
    %v523 = vsel %vm436, %v508, 0.0
    %v524 = vadd.f32 %v522, %v523
    %v525 = vsel %vm440, %v509, 0.0
    %v526 = vadd.f32 %v524, %v525
    %527 = vadd.xlane.f32.xlu0 %v526
    %v528 = vpop.xlane.xlu0 %527
    %v529 = vrot.slane %v528, 4
    %v530 = vadd.f32 %v528, %v529
    %v531 = vrot.slane %v530, 2
    %v532 = vadd.f32 %v530, %v531
    %v533 = vrot.slane %v532, 1
    %v534 = vadd.f32 %v532, %v533
    %s535 = vtos %v534
    %s536 = smul.f32 %s535, 0.0026455026
    %vm537 = vcmp.gt.f32.partialorder %v347, 0.0
    %vm538 = vcmp.gt.f32.partialorder %v348, 0.0
    %vm539 = vcmp.gt.f32.partialorder %v349, 0.0
    %v540 = vsub.f32 %v341, %v359
    %v541 = vsub.f32 %v342, %v360
    %v542 = vsub.f32 %v343, %v361
    %v543 = vsub.f32 %v344, %v362
    %v544 = vsub.f32 %v345, %v363
    %v545 = vsub.f32 %v346, %v364
    %v546 = vand.u32 2147483647, %v540
    %v547 = vand.u32 2147483647, %v541
    %v548 = vand.u32 2147483647, %v542
    %v549 = vand.u32 2147483647, %v543
    %v550 = vand.u32 2147483647, %v544
    %v551 = vand.u32 2147483647, %v545
    %v552 = vmul.f32 %v546, %v347
    %v553 = vmul.f32 %v547, %v348
    %v554 = vmul.f32 %v548, %v349
    %v555 = vmul.f32 %v549, %v347
    %v556 = vmul.f32 %v550, %v348
    %v557 = vmul.f32 %v551, %v349
    %v558 = vsel %vm537, 1, 0
    %v559 = vsel %vm538, 1, 0
    %v560 = vsel %vm539, 1, 0
    %vm561 = vcmp.eq.s32.totalorder %v558, 1
    %vm562 = vcmp.eq.s32.totalorder %v559, 1
    %vm563 = vcmp.eq.s32.totalorder %v560, 1
    %v564 = vsel %vm561, %v552, 0.0
    %v565 = vsel %vm562, %v553, 0.0
    %v566 = vsel %vm563, %v554, 0.0
    %v567 = vsel %vm561, %v555, 0.0
    %v568 = vsel %vm562, %v556, 0.0
    %v569 = vsel %vm563, %v557, 0.0
    %v570 = vsel %vm436, %v564, 0.0
    %v571 = vsel %vm436, %v565, 0.0
    %v572 = vadd.f32 %v570, %v571
    %v573 = vsel %vm440, %v566, 0.0
    %v574 = vadd.f32 %v572, %v573
    %v575 = vsel %vm436, %v567, 0.0
    %v576 = vadd.f32 %v574, %v575
    %v577 = vsel %vm436, %v568, 0.0
    %v578 = vadd.f32 %v576, %v577
    %v579 = vsel %vm440, %v569, 0.0
    %v580 = vadd.f32 %v578, %v579
    %581 = vadd.xlane.f32.xlu0 %v580
    %v582 = vpop.xlane.xlu0 %581
    %v583 = vrot.slane %v582, 4
    %v584 = vadd.f32 %v582, %v583
    %v585 = vrot.slane %v584, 2
    %v586 = vadd.f32 %v584, %v585
    %v587 = vrot.slane %v586, 1
    %v588 = vadd.f32 %v586, %v587
    %s589 = vtos %v588
    %s590 = smul.f32 %s589, 0.003968254
    %v591 = vsub.f32 %v350, %v359
    %v592 = vsub.f32 %v351, %v360
    %v593 = vsub.f32 %v352, %v361
    %v594 = vsub.f32 %v353, %v362
    %v595 = vsub.f32 %v354, %v363
    %v596 = vsub.f32 %v355, %v364
    %v597 = vsub.f32 %v356, %v365
    %v598 = vsub.f32 %v357, %v366
    %v599 = vsub.f32 %v358, %v367
    %v600 = vand.u32 2147483647, %v591
    %v601 = vand.u32 2147483647, %v592
    %v602 = vand.u32 2147483647, %v593
    %v603 = vand.u32 2147483647, %v594
    %v604 = vand.u32 2147483647, %v595
    %v605 = vand.u32 2147483647, %v596
    %v606 = vand.u32 2147483647, %v597
    %v607 = vand.u32 2147483647, %v598
    %v608 = vand.u32 2147483647, %v599
    %v609 = vmul.f32 %v600, %v347
    %v610 = vmul.f32 %v601, %v348
    %v611 = vmul.f32 %v602, %v349
    %v612 = vmul.f32 %v603, %v347
    %v613 = vmul.f32 %v604, %v348
    %v614 = vmul.f32 %v605, %v349
    %v615 = vmul.f32 %v606, %v347
    %v616 = vmul.f32 %v607, %v348
    %v617 = vmul.f32 %v608, %v349
    %v618 = vsel %vm561, %v609, 0.0
    %v619 = vsel %vm562, %v610, 0.0
    %v620 = vsel %vm563, %v611, 0.0
    %v621 = vsel %vm561, %v612, 0.0
    %v622 = vsel %vm562, %v613, 0.0
    %v623 = vsel %vm563, %v614, 0.0
    %v624 = vsel %vm561, %v615, 0.0
    %v625 = vsel %vm562, %v616, 0.0
    %v626 = vsel %vm563, %v617, 0.0
    %v627 = vsel %vm436, %v618, 0.0
    %v628 = vsel %vm436, %v619, 0.0
    %v629 = vadd.f32 %v627, %v628
    %v630 = vsel %vm440, %v620, 0.0
    %v631 = vadd.f32 %v629, %v630
    %v632 = vsel %vm436, %v621, 0.0
    %v633 = vadd.f32 %v631, %v632
    %v634 = vsel %vm436, %v622, 0.0
    %v635 = vadd.f32 %v633, %v634
    %v636 = vsel %vm440, %v623, 0.0
    %v637 = vadd.f32 %v635, %v636
    %v638 = vsel %vm436, %v624, 0.0
    %v639 = vadd.f32 %v637, %v638
    %v640 = vsel %vm436, %v625, 0.0
    %v641 = vadd.f32 %v639, %v640
    %v642 = vsel %vm440, %v626, 0.0
    %v643 = vadd.f32 %v641, %v642
    %644 = vadd.xlane.f32.xlu0 %v643
    %v645 = vpop.xlane.xlu0 %644
    %v646 = vrot.slane %v645, 4
    %v647 = vadd.f32 %v645, %v646
    %v648 = vrot.slane %v647, 2
    %v649 = vadd.f32 %v647, %v648
    %v650 = vrot.slane %v649, 1
    %v651 = vadd.f32 %v649, %v650
    %s652 = vtos %v651
    %s653 = smul.f32 %s652, 0.0026455026
    %vm654 = vcmp.gt.f32.partialorder %v380, 0.0
    %vm655 = vcmp.gt.f32.partialorder %v381, 0.0
    %vm656 = vcmp.gt.f32.partialorder %v382, 0.0
    %vm657 = vcmp.gt.f32.partialorder %v383, 0.0
    %vm658 = vcmp.gt.f32.partialorder %v384, 0.0
    %vm659 = vcmp.gt.f32.partialorder %v385, 0.0
    %v660 = vsub.f32 %v368, %v374
    %v661 = vsub.f32 %v369, %v375
    %v662 = vsub.f32 %v370, %v376
    %v663 = vsub.f32 %v371, %v377
    %v664 = vsub.f32 %v372, %v378
    %v665 = vsub.f32 %v373, %v379
    %v666 = vand.u32 2147483647, %v660
    %v667 = vand.u32 2147483647, %v661
    %v668 = vand.u32 2147483647, %v662
    %v669 = vand.u32 2147483647, %v663
    %v670 = vand.u32 2147483647, %v664
    %v671 = vand.u32 2147483647, %v665
    %v672 = vmul.f32 %v666, %v380
    %v673 = vmul.f32 %v667, %v381
    %v674 = vmul.f32 %v668, %v382
    %v675 = vmul.f32 %v669, %v383
    %v676 = vmul.f32 %v670, %v384
    %v677 = vmul.f32 %v671, %v385
    %v678 = vsel %vm654, %v672, 0.0
    %v679 = vsel %vm655, %v673, 0.0
    %v680 = vsel %vm656, %v674, 0.0
    %v681 = vsel %vm657, %v675, 0.0
    %v682 = vsel %vm658, %v676, 0.0
    %v683 = vsel %vm659, %v677, 0.0
    %v684 = vsel %vm436, %v678, 0.0
    %v685 = vsel %vm436, %v679, 0.0
    %v686 = vadd.f32 %v684, %v685
    %v687 = vsel %vm436, %v680, 0.0
    %v688 = vadd.f32 %v686, %v687
    %v689 = vsel %vm436, %v681, 0.0
    %v690 = vadd.f32 %v688, %v689
    %v691 = vsel %vm436, %v682, 0.0
    %v692 = vadd.f32 %v690, %v691
    %v693 = vsel %vm436, %v683, 0.0
    %v694 = vadd.f32 %v692, %v693
    %695 = vadd.xlane.f32.xlu0 %v694
    %v696 = vpop.xlane.xlu0 %695
    %v697 = vrot.slane %v696, 4
    %v698 = vadd.f32 %v696, %v697
    %v699 = vrot.slane %v698, 2
    %v700 = vadd.f32 %v698, %v699
    %v701 = vrot.slane %v700, 1
    %v702 = vadd.f32 %v700, %v701
    %s703 = vtos %v702
    %s704 = smul.f32 %s703, 0.0034722222
    %vm705 = vcmp.gt.f32.partialorder %v390, 0.0
    %v706 = vsub.f32 %v386, %v388
    %v707 = vsub.f32 %v387, %v389
    %v708 = vand.u32 2147483647, %v706
    %v709 = vand.u32 2147483647, %v707
    %v711 = vperm.slane %v390, 0
    %v713 = vmul.f32 %v708, %v711
    %v714 = vmul.f32 %v709, %v711
    %v715 = vsel %vm705, 1, 0
    %v716 = vperm.slane %v715, 0
    %vm717 = vcmp.eq.s32.totalorder %v716, 1
    %v718 = vsel %vm717, %v713, 0.0
    %v719 = vsel %vm717, %v714, 0.0
    %v720 = vsel %vm436, %v718, 0.0
    %vm721 = vcmask 41984
    %v722 = vsel %vm721, %v719, 0.0
    %v723 = vadd.f32 %v720, %v722
    %724 = vadd.xlane.f32.xlu0 %v723
    %v725 = vpop.xlane.xlu0 %724
    %v726 = vrot.slane %v725, 4
    %v727 = vadd.f32 %v725, %v726
    %v728 = vrot.slane %v727, 2
    %v729 = vadd.f32 %v727, %v728
    %v730 = vrot.slane %v729, 1
    %v731 = vadd.f32 %v729, %v730
    %s732 = vtos %v731
    %s733 = smul.f32 %s732, 0.016666668
    %v734 = vmul.f32 %v394, %v394
    %v735 = vmul.f32 %v395, %v395
    %v736 = vmul.f32 %v396, %v396
    %v737 = vmul.f32 %v397, %v397
    %v738 = vmul.f32 %v398, %v398
    %v739 = vmul.f32 %v399, %v399
    %v740 = vadd.f32 %v734, %v737
    %v741 = vadd.f32 %v735, %v738
    %v742 = vadd.f32 %v736, %v739
    %v743 = vmul.f32 %v400, %v400
    %v744 = vmul.f32 %v401, %v401
    %v745 = vmul.f32 %v402, %v402
    %v746 = vadd.f32 %v740, %v743
    %v747 = vadd.f32 %v741, %v744
    %v748 = vadd.f32 %v742, %v745
    %v749 = vrsqrt.pop %v746
    %v750 = vmul.f32 %v749, %v746
    %v751 = vmul.f32 %v750, %v749
    %v752 = vmul.f32 0.5, %v751
    %v753 = vsub.f32 1.5, %v752
    %v754 = vmul.f32 %v749, %v753
    %v755 = vmul.f32 %v746, %v754
    %vm756 = vcmp.eq.f32.partialorder %v746, inf
    %v757 = vsel %vm756, %v746, %v755
    %vm758 = vcmp.eq.f32.partialorder %v746, 0.0
    %v759 = vand.u32 %v746, 2147483648
    %v760 = vsel %vm758, %v759, %v757
    %v761 = vrsqrt.pop %v747
    %v762 = vmul.f32 %v761, %v747
    %v763 = vmul.f32 %v762, %v761
    %v764 = vmul.f32 0.5, %v763
    %v765 = vsub.f32 1.5, %v764
    %v766 = vmul.f32 %v761, %v765
    %v767 = vmul.f32 %v747, %v766
    %vm768 = vcmp.eq.f32.partialorder %v747, inf
    %v769 = vsel %vm768, %v747, %v767
    %vm770 = vcmp.eq.f32.partialorder %v747, 0.0
    %v771 = vand.u32 %v747, 2147483648
    %v772 = vsel %vm770, %v771, %v769
    %v773 = vrsqrt.pop %v748
    %v774 = vmul.f32 %v773, %v748
    %v775 = vmul.f32 %v774, %v773
    %v776 = vmul.f32 0.5, %v775
    %v777 = vsub.f32 1.5, %v776
    %v778 = vmul.f32 %v773, %v777
    %v779 = vmul.f32 %v748, %v778
    %vm780 = vcmp.eq.f32.partialorder %v748, inf
    %v781 = vsel %vm780, %v748, %v779
    %vm782 = vcmp.eq.f32.partialorder %v748, 0.0
    %v783 = vand.u32 %v748, 2147483648
    %v784 = vsel %vm782, %v783, %v781
    %v785 = vmul.f32 %v760, 1000.0
    %v786 = vmul.f32 %v772, 1000.0
    %v787 = vmul.f32 %v784, 1000.0
    %v788 = vsel %vm391, %v785, 0.0
    %v789 = vsel %vm392, %v786, 0.0
    %v790 = vsel %vm393, %v787, 0.0
    %v791 = vsel %vm436, %v788, 0.0
    %v792 = vsel %vm436, %v789, 0.0
    %v793 = vadd.f32 %v791, %v792
    %v794 = vsel %vm440, %v790, 0.0
    %v795 = vadd.f32 %v793, %v794
    %v796 = vrot.slane %v795, 4
    %v797 = vadd.f32 %v795, %v796
    %v798 = vrot.slane %v797, 2
    %v799 = vadd.f32 %v797, %v798
    %v800 = vrot.slane %v799, 1
    %v801 = vadd.f32 %v799, %v800
    %v802 = vcvt.s32.f32 %v421
    %v803 = vcvt.s32.f32 %v422
    %v804 = vcvt.s32.f32 %v423
    %v805 = vsel %vm436, %v802, 0.0
    %v806 = vsel %vm436, %v803, 0.0
    %v807 = vadd.f32 %v805, %v806
    %v808 = vsel %vm440, %v804, 0.0
    %v809 = vadd.f32 %v807, %v808
    %v810 = vrot.slane %v809, 4
    %v811 = vadd.f32 %v809, %v810
    %v812 = vrot.slane %v811, 2
    %v813 = vadd.f32 %v811, %v812
    %v814 = vrot.slane %v813, 1
    %v815 = vadd.f32 %v813, %v814
    %vm816 = vcmp.gt.f32.partialorder %v815, 0.0
    %v817 = vsel %vm816, %v815, 1.0
    %v818 = vrcp.pop %v817
    %v819 = vmul.f32 %v817, %v818
    %v820 = vsub.f32 1.0, %v819
    %v821 = vmul.f32 %v818, %v820
    %v822 = vadd.f32 %v818, %v821
    %vm823 = vweird.f32 %v817
    %vm824 = vweird.f32 %v818
    %vm825 = vmor %vm823, %vm824
    %v826 = vsel %vm825, %v818, %v822
    %v827 = vand.u32 2147483647, %v817
    %vm828 = vcmp.eq.f32.partialorder %v827, 8.507059e+37
    %v829 = vand.u32 %v817, 2147483648
    %v830 = vor.u32 1.1754944e-38, %v829
    %v831 = vsel %vm828, %v830, %v826
    %v832 = vmul.f32 %v801, %v831
    %v833 = vsel %vm816, %v832, 0.0
    %vm834 = vcmask 40960
    %v835 = vsel %vm834, %v833, 0.0
    %836 = vadd.xlane.f32.xlu0 %v835
    %v837 = vpop.xlane.xlu0 %836
    %v838 = vrot.slane %v837, 4
    %v839 = vadd.f32 %v837, %v838
    %v840 = vrot.slane %v839, 2
    %v841 = vadd.f32 %v839, %v840
    %v842 = vrot.slane %v841, 1
    %v843 = vadd.f32 %v841, %v842
    %s844 = vtos %v843
    %v845 = vsel %vm816, 1, 0
    %v846 = vcvt.s32.f32 %v845
    %v847 = vsel %vm834, %v846, 0.0
    %848 = vadd.xlane.f32.xlu0 %v847
    %v849 = vpop.xlane.xlu0 %848
    %v850 = vrot.slane %v849, 4
    %v851 = vadd.f32 %v849, %v850
    %v852 = vrot.slane %v851, 2
    %v853 = vadd.f32 %v851, %v852
    %v854 = vrot.slane %v853, 1
    %v855 = vadd.f32 %v853, %v854
    %s856 = vtos %v855
    %v857 = vlaneseq
    %v858 = vand.u32 %v857, 127
    %vm859 = vcmp.eq.s32.totalorder %v858, 0
    %v860 = vstv %s464
    %v861 = vsel %vm859, %v860, 0.0
    %vm862 = vcmp.eq.s32.totalorder %v858, 1
    %v863 = vstv %s536
    %v864 = vsel %vm862, %v863, %v861
    %vm865 = vcmp.eq.s32.totalorder %v858, 2
    %v866 = vstv %s590
    %v867 = vsel %vm865, %v866, %v864
    %vm868 = vcmp.eq.s32.totalorder %v858, 3
    %v869 = vstv %s653
    %v870 = vsel %vm868, %v869, %v867
    %vm871 = vcmp.eq.s32.totalorder %v858, 4
    %v872 = vstv %s704
    %v873 = vsel %vm871, %v872, %v870
    %vm874 = vcmp.eq.s32.totalorder %v858, 5
    %v875 = vstv %s733
    %v876 = vsel %vm874, %v875, %v873
    %vm877 = vcmp.eq.s32.totalorder %v858, 6
    %v878 = vstv %s844
    %v879 = vsel %vm877, %v878, %v876
    %vm880 = vcmp.eq.s32.totalorder %v858, 7
    %v881 = vstv %s856
    %v882 = vsel %vm880, %v881, %v879
    %v883 = vld [vmem:[#allocation2] sm:$0xff]
    %v884 = vadd.f32 %v883, %v882
    %885 = vst [vmem:[#allocation2] sm:$0xff] %v884
    // Predicated region
    $region66: #{tpu_custom_call.1} parent=1 // pred_check
      _
    $region67: #{tpu_custom_call.1} parent=1 // pred_check_branch
      %887 = sbr.rel (0) target = $region69
    $region68: #{tpu_custom_call.1} parent=1 // pred_region
      %889 = vsyncadd [#allocation3], 0
      %s891 = sshll.u32 [#allocation2], 4
      %s892 = int_to_ptr.vmem [resolvable:$true] %s891
      %s893 = sshll.u32 %s15, 4
      %s894 = int_to_ptr.hbm [resolvable:$true] %s893
      %896 = dma.vmem_to_hbm [thread:$0]  %s892, 128, %s894, [#allocation3]
    $region69: #{tpu_custom_call.1} parent=1 // pred_fallthru
      _
    // Predicated region
    $region70: #{tpu_custom_call.1} parent=1 // pred_check
      _
    $region71: #{tpu_custom_call.1} parent=1 // pred_check_branch
      %898 = sbr.rel (0) target = $region73
    $region72: #{tpu_custom_call.1} parent=1 // pred_region
      %900 = dma.done [#allocation3], 128
    $region73: #{tpu_custom_call.1} parent=1 // pred_fallthru
      _
    %901 = vsyncpa [#allocation3], 1

</llo_original>
